<compile_context>
chip_gen: v5e
topology: v5e:2x2
jax: 0.10.0
libtpu: 0.0.40
codegen_flags: <defaults>
</compile_context>

<pallas_src>
import functools

import jax
import jax.numpy as jnp
from jax.experimental import pallas as pl
from jax.experimental.pallas import tpu as pltpu

BN_EPS = 1e-5
LEAKY_SLOPE = 0.01  # PyTorch nn.LeakyReLU default


def _round_up(x, m):
    return (x + m - 1) // m * m


# ---------------------------------------------------------------------------
# In-kernel fused im2col + conv (transposed GEMM: channels on sublanes)
# ---------------------------------------------------------------------------
def _conv_accumulate(x_ref, w_ref, *, kh, kw, wp, s_out, stride):
    """Conv for one whole image, accumulated in f32.

    x_ref : (1, cin_p, sin)        bf16  zero-padded image, spatially flattened.
    w_ref : (kh*kw, c_sub, cin_p)  bf16  weight[co, ci, di, dj] at [di*kw+dj, co, ci].

    Returns (c_sub, s_out) f32 where column k = ho*wp + wo' holds the conv
    output at (ho, wo') when wo' < wo, and finite garbage otherwise (masked in
    pass 1, sliced off in the wrapper after pass 2).
    """
    acc = None
    for di in range(kh):
        for dj in range(kw):
            base = di * wp + dj                       # static Python int offset
            if stride == 1:
                slab = x_ref[0, :, pl.ds(base, s_out)]            # (cin_p, s_out)
            else:
                # TODO(synk): stride>1 uses a static strided lane read; it is
                # correctness-preserving but unoptimized and not exercised below.
                slab = x_ref[0, :, pl.ds(base, s_out, stride=stride)]
            part = jnp.dot(w_ref[di * kw + dj, :, :], slab,
                           preferred_element_type=jnp.float32)    # bf16 MXU -> f32
            acc = part if acc is None else acc + part
    return acc


def _stats_kernel(x_ref, w_ref, stats_ref, *, kh, kw, wp, wo, s_out, stride):
    """Pass 1: per-channel sum / sum-of-squares of the (bias-free) conv output."""
    @pl.when(pl.program_id(1) == 0)
    def _init():
        stats_ref[...] = jnp.zeros_like(stats_ref)

    acc = _conv_accumulate(x_ref, w_ref, kh=kh, kw=kw, wp=wp,
                           s_out=s_out, stride=stride)
    col = jax.lax.broadcasted_iota(jnp.int32, (1, s_out), 1)
    masked = jnp.where((col % wp) < wo, acc, 0.0)     # drop garbage columns
    stats_ref[0, :, 0:1] += jnp.sum(masked, axis=1, keepdims=True)
    stats_ref[0, :, 1:2] += jnp.sum(masked * masked, axis=1, keepdims=True)


def _apply_kernel(x_ref, w_ref, scale_ref, shift_ref, o_ref,
                  *, kh, kw, wp, s_out, stride):
    """Pass 2: recompute the cheap conv, folded BN (one FMA) + LeakyReLU, store."""
    acc = _conv_accumulate(x_ref, w_ref, kh=kh, kw=kw, wp=wp,
                           s_out=s_out, stride=stride)
    y = acc * scale_ref[...] + shift_ref[...]         # f32 epilogue (v5e-friendly)
    o_ref[0, :, :] = jnp.where(y > 0, y, LEAKY_SLOPE * y)


# ---------------------------------------------------------------------------
# Wrapper
# ---------------------------------------------------------------------------
@functools.partial(jax.jit, static_argnames=("stride", "padding"))
def conv_single_forward(x, weight, bias, gamma, beta, *, stride, padding):
    """x: (N, C_in, H, W); weight: (C_out, C_in, kh, kw). Returns NCHW f32."""
    n, c_in, h, w = x.shape
    c_out, _, kh, kw = weight.shape
    s, p = stride, padding

    hp, wp = h + 2 * p, w + 2 * p
    ho = (hp - kh) // s + 1
    wo = (wp - kw) // s + 1

    cin_p = _round_up(c_in, 8)        # sublane granule; a few KiB of zero pad
    c_sub = _round_up(c_out, 8)       # channels live on sublanes (8), NOT 128 lanes
    s_out = ho * wp                   # flat conv output length (incl. garbage cols)
    sin_need = (kh - 1) * wp + (kw - 1) + s * (s_out - 1) + 1
    sin = _round_up(sin_need, 128)    # lane-dense flat input

    # Raw input only: bf16 cast, zero-pad channels + spatial halo, flatten spatial.
    # (This is the ONLY conv operand in HBM — no expanded patch matrix.)
    x_b = x.astype(jnp.bfloat16)
    x_pad = jnp.pad(x_b, ((0, 0), (0, cin_p - c_in), (p, p), (p, p)))
    x_flat = x_pad.reshape(n, cin_p, hp * wp)
    x_flat = jnp.pad(x_flat, ((0, 0), (0, 0), (0, sin - hp * wp)))

    # Weights -> (kh*kw, c_sub, cin_p) bf16.
    w_t = jnp.transpose(weight, (2, 3, 0, 1)).reshape(kh * kw, c_out, c_in)
    w_t = jnp.pad(w_t, ((0, 0), (0, c_sub - c_out), (0, cin_p - c_in)))
    w_t = w_t.astype(jnp.bfloat16)

    # Training-mode BatchNorm subtracts the batch mean, which exactly cancels
    # the Conv2d bias in the forward output, so the bias is dropped.
    del bias

    # v7x: shard pass-1 images across both TensorCores with per-core stat slabs.
    num_par = 2 if n % 2 == 0 else 1
    per_core = n // num_par

    compiler_common = dict(vmem_limit_bytes=32 * 1024 * 1024)
    consts = dict(kh=kh, kw=kw, wp=wp, s_out=s_out, stride=s)

    # ---- Pass 1: per-channel sum / sum-of-squares of the conv output --------
    stats = pl.pallas_call(
        functools.partial(_stats_kernel, wo=wo, **consts),
        out_shape=jax.ShapeDtypeStruct((num_par, c_sub, 2), jnp.float32),
        grid=(num_par, per_core),
        in_specs=[
            pl.BlockSpec((1, cin_p, sin), lambda pc, i: (pc * per_core + i, 0, 0)),
            pl.BlockSpec((kh * kw, c_sub, cin_p), lambda pc, i: (0, 0, 0)),
        ],
        out_specs=pl.BlockSpec((1, c_sub, 2), lambda pc, i: (pc, 0, 0)),
        compiler_params=pltpu.CompilerParams(
            dimension_semantics=("parallel", "arbitrary"), **compiler_common),
    )(x_flat, w_t)

    stats = jnp.sum(stats, axis=0)                     # combine per-core partials
    m_true = jnp.float32(n * ho * wo)
    mean = stats[:, 0] / m_true
    var = jnp.maximum(stats[:, 1] / m_true - mean * mean, 0.0)
    gamma_p = jnp.pad(gamma.astype(jnp.float32), (0, c_sub - c_out))
    beta_p = jnp.pad(beta.astype(jnp.float32), (0, c_sub - c_out))
    scale = gamma_p * jax.lax.rsqrt(var + BN_EPS)      # (c_sub,)
    shift = beta_p - mean * scale

    # ---- Pass 2: recompute conv, normalize + LeakyReLU (core-parallel) -------
    out_flat = pl.pallas_call(
        functools.partial(_apply_kernel, **consts),
        out_shape=jax.ShapeDtypeStruct((n, c_sub, s_out), jnp.float32),
        grid=(n,),
        in_specs=[
            pl.BlockSpec((1, cin_p, sin), lambda i: (i, 0, 0)),
            pl.BlockSpec((kh * kw, c_sub, cin_p), lambda i: (0, 0, 0)),
            pl.BlockSpec((c_sub, 1), lambda i: (0, 0)),
            pl.BlockSpec((c_sub, 1), lambda i: (0, 0)),
        ],
        out_specs=pl.BlockSpec((1, c_sub, s_out), lambda i: (i, 0, 0)),
        compiler_params=pltpu.CompilerParams(
            dimension_semantics=("parallel",), **compiler_common),
    )(x_flat, w_t, scale.reshape(c_sub, 1), shift.reshape(c_sub, 1))

    # Free metadata reshape to (N, c_sub, Ho, Wp); drop only the thin garbage strip
    # (Wp -> Wo, and c_sub -> C_out when C_out is not a multiple of 8). This is
    # ~1.1x of the true output, vs the old 16x-lane-padded write + full transpose.
    out = out_flat.reshape(n, c_sub, ho, wp)[:, :c_out, :, :wo]
    return out


# ---------------------------------------------------------------------------
# Pure-JAX reference (independent of the kernel's index math)
# ---------------------------------------------------------------------------
def _reference_forward(x, weight, bias, gamma, beta, *, stride, padding):
    xb = x.astype(jnp.bfloat16).astype(jnp.float32)        # match kernel's bf16 operands
    wb = weight.astype(jnp.bfloat16).astype(jnp.float32)
    conv = jax.lax.conv_general_dilated(
        xb, wb, window_strides=(stride, stride),
        padding=[(padding, padding), (padding, padding)],
        dimension_numbers=("NCHW", "OIHW", "NCHW"),
        precision=jax.lax.Precision.HIGHEST)
    conv = conv + bias.astype(jnp.float32)[None, :, None, None]
    mean = jnp.mean(conv, axis=(0, 2, 3), keepdims=True)
    var = jnp.mean((conv - mean) ** 2, axis=(0, 2, 3), keepdims=True)
    y = (conv - mean) * jax.lax.rsqrt(var + BN_EPS)
    y = y * gamma[None, :, None, None] + beta[None, :, None, None]
    return jnp.where(y > 0, y, LEAKY_SLOPE * y)


if __name__ == "__main__":
    # ConvSingle(d_in=4, d_out=8, kernel_size=3, stride=1, padding=1)
    N, D_IN, H, W = 2, 4, 16, 16
    D_OUT, K, STRIDE, PAD = 8, 3, 1, 1

    key = jax.random.PRNGKey(0)
    kx, kw_, kb = jax.random.split(key, 3)

    x = jax.random.normal(kx, (N, D_IN, H, W), dtype=jnp.float32)

    fan_in = D_IN * K * K
    bound = 1.0 / (fan_in ** 0.5)
    conv_w = jax.random.uniform(kw_, (D_OUT, D_IN, K, K), jnp.float32, -bound, bound)
    conv_b = jax.random.uniform(kb, (D_OUT,), jnp.float32, -bound, bound)
    bn_gamma = jnp.ones((D_OUT,), jnp.float32)
    bn_beta = jnp.zeros((D_OUT,), jnp.float32)

    out = conv_single_forward(
        x, conv_w, conv_b, bn_gamma, bn_beta, stride=STRIDE, padding=PAD
    )
    jax.block_until_ready(out)
    assert out.shape == (N, D_OUT, H, W), out.shape

    ref = _reference_forward(
        x, conv_w, conv_b, bn_gamma, bn_beta, stride=STRIDE, padding=PAD
    )
    max_err = float(jnp.max(jnp.abs(out - ref)))
    assert max_err < 1e-2, f"max abs error vs reference: {max_err}"

    print("KERNEL_OK")
</pallas_src>

<mosaic_0001>
module attributes {stable_mosaic.version = 11 : i64} {
  func.func @_stats_kernel(%arg0: i32, %arg1: i32, %arg2: memref<1x8x384xbf16, #tpu.memory_space<vmem>>, %arg3: memref<9x8x8xbf16, #tpu.memory_space<vmem>>, %arg4: memref<1x8x2xf32, #tpu.memory_space<vmem>>) attributes {dimension_semantics = [#tpu.dimension_semantics<parallel>, #tpu.dimension_semantics<arbitrary>], iteration_bounds = array<i64: 2, 1>, scalar_prefetch = 0 : i64, scratch_operands = 0 : i64, tpu.core_type = #tpu.core_type<tc>, window_params = [{transform_indices = @transform_0, window_bounds = array<i64: 1, 8, 384>}, {pipeline_mode = #tpu.pipeline_mode<synchronous>, transform_indices = @transform_1, window_bounds = array<i64: 9, 8, 8>}, {transform_indices = @transform_2, window_bounds = array<i64: 1, 8, 2>}]} {
    %c0_i32 = arith.constant 0 : i32
    %0 = arith.cmpi eq, %arg1, %c0_i32 : i32
    %1 = arith.extui %0 : i1 to i32
    %c0_i32_0 = arith.constant 0 : i32
    %2 = arith.cmpi ne, %1, %c0_i32_0 : i32
    scf.if %2 {
      %cst_67 = arith.constant 0.000000e+00 : f32
      %96 = vector.broadcast %cst_67 : f32 to vector<1x8x2xf32>
      %c0_68 = arith.constant 0 : index
      %c0_69 = arith.constant 0 : index
      %c0_70 = arith.constant 0 : index
      %97 = vector.load %arg4[%c0_68, %c0_69, %c0_70] : memref<1x8x2xf32, #tpu.memory_space<vmem>>, vector<1x8x2xf32>
      tpu.vector_store %arg4[%c0_68, %c0_69, %c0_70], %96 {strides = array<i32>} : memref<1x8x2xf32, #tpu.memory_space<vmem>>, vector<1x8x2xf32>,
    } else {
    }
    %c0 = arith.constant 0 : index
    %c0_1 = arith.constant 0 : index
    %c0_2 = arith.constant 0 : index
    %3 = vector.load %arg2[%c0, %c0_1, %c0_2] : memref<1x8x384xbf16, #tpu.memory_space<vmem>>, vector<1x8x288xbf16>
    %4 = vector.shape_cast %3 : vector<1x8x288xbf16> to vector<8x288xbf16>
    %c0_3 = arith.constant 0 : index
    %c0_4 = arith.constant 0 : index
    %c0_5 = arith.constant 0 : index
    %5 = vector.load %arg3[%c0_3, %c0_4, %c0_5] : memref<9x8x8xbf16, #tpu.memory_space<vmem>>, vector<1x8x8xbf16>
    %6 = vector.shape_cast %5 : vector<1x8x8xbf16> to vector<8x8xbf16>
    %cst = arith.constant dense<0.000000e+00> : vector<8x288xf32>
    %7 = tpu.matmul %6, %4, %cst {dimension_numbers = #tpu.dot_dimension_numbers<[1], [0], [0], [1], [0, 0, 1, 1], [], []>} : vector<8x8xbf16>, vector<8x288xbf16>, vector<8x288xf32> -> vector<8x288xf32>
    %c0_6 = arith.constant 0 : index
    %c0_7 = arith.constant 0 : index
    %c1 = arith.constant 1 : index
    %8 = vector.load %arg2[%c0_6, %c0_7, %c1] : memref<1x8x384xbf16, #tpu.memory_space<vmem>>, vector<1x8x288xbf16>
    %9 = vector.shape_cast %8 : vector<1x8x288xbf16> to vector<8x288xbf16>
    %c1_8 = arith.constant 1 : index
    %c0_9 = arith.constant 0 : index
    %c0_10 = arith.constant 0 : index
    %10 = vector.load %arg3[%c1_8, %c0_9, %c0_10] : memref<9x8x8xbf16, #tpu.memory_space<vmem>>, vector<1x8x8xbf16>
    %11 = vector.shape_cast %10 : vector<1x8x8xbf16> to vector<8x8xbf16>
    %cst_11 = arith.constant dense<0.000000e+00> : vector<8x288xf32>
    %12 = tpu.matmul %11, %9, %cst_11 {dimension_numbers = #tpu.dot_dimension_numbers<[1], [0], [0], [1], [0, 0, 1, 1], [], []>} : vector<8x8xbf16>, vector<8x288xbf16>, vector<8x288xf32> -> vector<8x288xf32>
    %13 = arith.addf %7, %12 : vector<8x288xf32>
    %c0_12 = arith.constant 0 : index
    %c0_13 = arith.constant 0 : index
    %c2 = arith.constant 2 : index
    %14 = vector.load %arg2[%c0_12, %c0_13, %c2] : memref<1x8x384xbf16, #tpu.memory_space<vmem>>, vector<1x8x288xbf16>
    %15 = vector.shape_cast %14 : vector<1x8x288xbf16> to vector<8x288xbf16>
    %c2_14 = arith.constant 2 : index
    %c0_15 = arith.constant 0 : index
    %c0_16 = arith.constant 0 : index
    %16 = vector.load %arg3[%c2_14, %c0_15, %c0_16] : memref<9x8x8xbf16, #tpu.memory_space<vmem>>, vector<1x8x8xbf16>
    %17 = vector.shape_cast %16 : vector<1x8x8xbf16> to vector<8x8xbf16>
    %cst_17 = arith.constant dense<0.000000e+00> : vector<8x288xf32>
    %18 = tpu.matmul %17, %15, %cst_17 {dimension_numbers = #tpu.dot_dimension_numbers<[1], [0], [0], [1], [0, 0, 1, 1], [], []>} : vector<8x8xbf16>, vector<8x288xbf16>, vector<8x288xf32> -> vector<8x288xf32>
    %19 = arith.addf %13, %18 : vector<8x288xf32>
    %c0_18 = arith.constant 0 : index
    %c0_19 = arith.constant 0 : index
    %c18 = arith.constant 18 : index
    %20 = vector.load %arg2[%c0_18, %c0_19, %c18] : memref<1x8x384xbf16, #tpu.memory_space<vmem>>, vector<1x8x288xbf16>
    %21 = vector.shape_cast %20 : vector<1x8x288xbf16> to vector<8x288xbf16>
    %c3 = arith.constant 3 : index
    %c0_20 = arith.constant 0 : index
    %c0_21 = arith.constant 0 : index
    %22 = vector.load %arg3[%c3, %c0_20, %c0_21] : memref<9x8x8xbf16, #tpu.memory_space<vmem>>, vector<1x8x8xbf16>
    %23 = vector.shape_cast %22 : vector<1x8x8xbf16> to vector<8x8xbf16>
    %cst_22 = arith.constant dense<0.000000e+00> : vector<8x288xf32>
    %24 = tpu.matmul %23, %21, %cst_22 {dimension_numbers = #tpu.dot_dimension_numbers<[1], [0], [0], [1], [0, 0, 1, 1], [], []>} : vector<8x8xbf16>, vector<8x288xbf16>, vector<8x288xf32> -> vector<8x288xf32>
    %25 = arith.addf %19, %24 : vector<8x288xf32>
    %c0_23 = arith.constant 0 : index
    %c0_24 = arith.constant 0 : index
    %c19 = arith.constant 19 : index
    %26 = vector.load %arg2[%c0_23, %c0_24, %c19] : memref<1x8x384xbf16, #tpu.memory_space<vmem>>, vector<1x8x288xbf16>
    %27 = vector.shape_cast %26 : vector<1x8x288xbf16> to vector<8x288xbf16>
    %c4 = arith.constant 4 : index
    %c0_25 = arith.constant 0 : index
    %c0_26 = arith.constant 0 : index
    %28 = vector.load %arg3[%c4, %c0_25, %c0_26] : memref<9x8x8xbf16, #tpu.memory_space<vmem>>, vector<1x8x8xbf16>
    %29 = vector.shape_cast %28 : vector<1x8x8xbf16> to vector<8x8xbf16>
    %cst_27 = arith.constant dense<0.000000e+00> : vector<8x288xf32>
    %30 = tpu.matmul %29, %27, %cst_27 {dimension_numbers = #tpu.dot_dimension_numbers<[1], [0], [0], [1], [0, 0, 1, 1], [], []>} : vector<8x8xbf16>, vector<8x288xbf16>, vector<8x288xf32> -> vector<8x288xf32>
    %31 = arith.addf %25, %30 : vector<8x288xf32>
    %c0_28 = arith.constant 0 : index
    %c0_29 = arith.constant 0 : index
    %c20 = arith.constant 20 : index
    %32 = vector.load %arg2[%c0_28, %c0_29, %c20] : memref<1x8x384xbf16, #tpu.memory_space<vmem>>, vector<1x8x288xbf16>
    %33 = vector.shape_cast %32 : vector<1x8x288xbf16> to vector<8x288xbf16>
    %c5 = arith.constant 5 : index
    %c0_30 = arith.constant 0 : index
    %c0_31 = arith.constant 0 : index
    %34 = vector.load %arg3[%c5, %c0_30, %c0_31] : memref<9x8x8xbf16, #tpu.memory_space<vmem>>, vector<1x8x8xbf16>
    %35 = vector.shape_cast %34 : vector<1x8x8xbf16> to vector<8x8xbf16>
    %cst_32 = arith.constant dense<0.000000e+00> : vector<8x288xf32>
    %36 = tpu.matmul %35, %33, %cst_32 {dimension_numbers = #tpu.dot_dimension_numbers<[1], [0], [0], [1], [0, 0, 1, 1], [], []>} : vector<8x8xbf16>, vector<8x288xbf16>, vector<8x288xf32> -> vector<8x288xf32>
    %37 = arith.addf %31, %36 : vector<8x288xf32>
    %c0_33 = arith.constant 0 : index
    %c0_34 = arith.constant 0 : index
    %c36 = arith.constant 36 : index
    %38 = vector.load %arg2[%c0_33, %c0_34, %c36] : memref<1x8x384xbf16, #tpu.memory_space<vmem>>, vector<1x8x288xbf16>
    %39 = vector.shape_cast %38 : vector<1x8x288xbf16> to vector<8x288xbf16>
    %c6 = arith.constant 6 : index
    %c0_35 = arith.constant 0 : index
    %c0_36 = arith.constant 0 : index
    %40 = vector.load %arg3[%c6, %c0_35, %c0_36] : memref<9x8x8xbf16, #tpu.memory_space<vmem>>, vector<1x8x8xbf16>
    %41 = vector.shape_cast %40 : vector<1x8x8xbf16> to vector<8x8xbf16>
    %cst_37 = arith.constant dense<0.000000e+00> : vector<8x288xf32>
    %42 = tpu.matmul %41, %39, %cst_37 {dimension_numbers = #tpu.dot_dimension_numbers<[1], [0], [0], [1], [0, 0, 1, 1], [], []>} : vector<8x8xbf16>, vector<8x288xbf16>, vector<8x288xf32> -> vector<8x288xf32>
    %43 = arith.addf %37, %42 : vector<8x288xf32>
    %c0_38 = arith.constant 0 : index
    %c0_39 = arith.constant 0 : index
    %c37 = arith.constant 37 : index
    %44 = vector.load %arg2[%c0_38, %c0_39, %c37] : memref<1x8x384xbf16, #tpu.memory_space<vmem>>, vector<1x8x288xbf16>
    %45 = vector.shape_cast %44 : vector<1x8x288xbf16> to vector<8x288xbf16>
    %c7 = arith.constant 7 : index
    %c0_40 = arith.constant 0 : index
    %c0_41 = arith.constant 0 : index
    %46 = vector.load %arg3[%c7, %c0_40, %c0_41] : memref<9x8x8xbf16, #tpu.memory_space<vmem>>, vector<1x8x8xbf16>
    %47 = vector.shape_cast %46 : vector<1x8x8xbf16> to vector<8x8xbf16>
    %cst_42 = arith.constant dense<0.000000e+00> : vector<8x288xf32>
    %48 = tpu.matmul %47, %45, %cst_42 {dimension_numbers = #tpu.dot_dimension_numbers<[1], [0], [0], [1], [0, 0, 1, 1], [], []>} : vector<8x8xbf16>, vector<8x288xbf16>, vector<8x288xf32> -> vector<8x288xf32>
    %49 = arith.addf %43, %48 : vector<8x288xf32>
    %c0_43 = arith.constant 0 : index
    %c0_44 = arith.constant 0 : index
    %c38 = arith.constant 38 : index
    %50 = vector.load %arg2[%c0_43, %c0_44, %c38] : memref<1x8x384xbf16, #tpu.memory_space<vmem>>, vector<1x8x288xbf16>
    %51 = vector.shape_cast %50 : vector<1x8x288xbf16> to vector<8x288xbf16>
    %c8 = arith.constant 8 : index
    %c0_45 = arith.constant 0 : index
    %c0_46 = arith.constant 0 : index
    %52 = vector.load %arg3[%c8, %c0_45, %c0_46] : memref<9x8x8xbf16, #tpu.memory_space<vmem>>, vector<1x8x8xbf16>
    %53 = vector.shape_cast %52 : vector<1x8x8xbf16> to vector<8x8xbf16>
    %cst_47 = arith.constant dense<0.000000e+00> : vector<8x288xf32>
    %54 = tpu.matmul %53, %51, %cst_47 {dimension_numbers = #tpu.dot_dimension_numbers<[1], [0], [0], [1], [0, 0, 1, 1], [], []>} : vector<8x8xbf16>, vector<8x288xbf16>, vector<8x288xf32> -> vector<8x288xf32>
    %55 = arith.addf %49, %54 : vector<8x288xf32>
    %56 = tpu.iota {dimensions = array<i32: 1>} : vector<1x288xi32>
    %c18_i32 = arith.constant 18 : i32
    %c0_i32_48 = arith.constant 0 : i32
    %57 = arith.cmpi eq, %c18_i32, %c0_i32_48 : i32
    %c1_i32 = arith.constant 1 : i32
    %58 = arith.select %57, %c1_i32, %c18_i32 : i32
    %59 = vector.broadcast %58 : i32 to vector<1x288xi32>
    %60 = arith.remsi %56, %59 : vector<1x288xi32>
    %c0_i32_49 = arith.constant 0 : i32
    %61 = vector.broadcast %c0_i32_49 : i32 to vector<1x288xi32>
    %62 = arith.cmpi ne, %60, %61 : vector<1x288xi32>
    %c0_i32_50 = arith.constant 0 : i32
    %63 = vector.broadcast %c0_i32_50 : i32 to vector<1x288xi32>
    %64 = arith.cmpi slt, %60, %63 : vector<1x288xi32>
    %c0_i32_51 = arith.constant 0 : i32
    %65 = arith.cmpi slt, %58, %c0_i32_51 : i32
    %66 = vector.broadcast %65 : i1 to vector<1x288xi1>
    %67 = vector.broadcast %66 : vector<1x288xi1> to vector<1x288xi1>
    %68 = arith.xori %64, %67 : vector<1x288xi1>
    %69 = arith.andi %68, %62 : vector<1x288xi1>
    %70 = vector.broadcast %58 : i32 to vector<1x288xi32>
    %71 = arith.addi %60, %70 : vector<1x288xi32>
    %72 = arith.select %69, %71, %60 : vector<1x288xi1>, vector<1x288xi32>
    %c16_i32 = arith.constant 16 : i32
    %73 = vector.broadcast %c16_i32 : i32 to vector<1x288xi32>
    %74 = arith.cmpi slt, %72, %73 : vector<1x288xi32>
    %cst_52 = arith.constant 0.000000e+00 : f32
    %75 = vector.shape_cast %74 : vector<1x288xi1> to vector<1x288xi1>
    %76 = vector.broadcast %75 : vector<1x288xi1> to vector<8x288xi1>
    %77 = vector.broadcast %cst_52 : f32 to vector<8x288xf32>
    %78 = arith.select %76, %55, %77 : vector<8x288xi1>, vector<8x288xf32>
    %c0_53 = arith.constant 0 : index
    %c0_54 = arith.constant 0 : index
    %c0_55 = arith.constant 0 : index
    %79 = vector.load %arg4[%c0_53, %c0_54, %c0_55] : memref<1x8x2xf32, #tpu.memory_space<vmem>>, vector<1x8x1xf32>
    %80 = vector.shape_cast %79 : vector<1x8x1xf32> to vector<8x1xf32>
    %cst_56 = arith.constant dense<0.000000e+00> : vector<8xf32>
    %81 = vector.multi_reduction <add>, %78, %cst_56 [1] : vector<8x288xf32> to vector<8xf32>
    %82 = vector.shape_cast %81 : vector<8xf32> to vector<8x1xf32>
    %83 = arith.addf %80, %82 : vector<8x1xf32>
    %c0_57 = arith.constant 0 : index
    %c0_58 = arith.constant 0 : index
    %c0_59 = arith.constant 0 : index
    %84 = vector.load %arg4[%c0_57, %c0_58, %c0_59] : memref<1x8x2xf32, #tpu.memory_space<vmem>>, vector<1x8x1xf32>
    %85 = vector.shape_cast %84 : vector<1x8x1xf32> to vector<8x1xf32>
    %86 = vector.shape_cast %83 : vector<8x1xf32> to vector<1x8x1xf32>
    tpu.vector_store %arg4[%c0_57, %c0_58, %c0_59], %86 {strides = array<i32>} : memref<1x8x2xf32, #tpu.memory_space<vmem>>, vector<1x8x1xf32>,
    %c0_60 = arith.constant 0 : index
    %c0_61 = arith.constant 0 : index
    %c1_62 = arith.constant 1 : index
    %87 = vector.load %arg4[%c0_60, %c0_61, %c1_62] : memref<1x8x2xf32, #tpu.memory_space<vmem>>, vector<1x8x1xf32>
    %88 = vector.shape_cast %87 : vector<1x8x1xf32> to vector<8x1xf32>
    %89 = arith.mulf %78, %78 : vector<8x288xf32>
    %cst_63 = arith.constant dense<0.000000e+00> : vector<8xf32>
    %90 = vector.multi_reduction <add>, %89, %cst_63 [1] : vector<8x288xf32> to vector<8xf32>
    %91 = vector.shape_cast %90 : vector<8xf32> to vector<8x1xf32>
    %92 = arith.addf %88, %91 : vector<8x1xf32>
    %c0_64 = arith.constant 0 : index
    %c0_65 = arith.constant 0 : index
    %c1_66 = arith.constant 1 : index
    %93 = vector.load %arg4[%c0_64, %c0_65, %c1_66] : memref<1x8x2xf32, #tpu.memory_space<vmem>>, vector<1x8x1xf32>
    %94 = vector.shape_cast %93 : vector<1x8x1xf32> to vector<8x1xf32>
    %95 = vector.shape_cast %92 : vector<8x1xf32> to vector<1x8x1xf32>
    tpu.vector_store %arg4[%c0_64, %c0_65, %c1_66], %95 {strides = array<i32>} : memref<1x8x2xf32, #tpu.memory_space<vmem>>, vector<1x8x1xf32>,
    return
  }
  func.func @transform_0(%arg0: i32, %arg1: i32) -> (i32, i32, i32) {
    %c1_i32 = arith.constant 1 : i32
    %0 = arith.muli %arg0, %c1_i32 : i32
    %1 = arith.addi %0, %arg1 : i32
    %c0_i32 = arith.constant 0 : i32
    %c0_i32_0 = arith.constant 0 : i32
    %c0_i32_1 = arith.constant 0 : i32
    return %1, %c0_i32, %c0_i32_0 : i32, i32, i32
  }
  func.func @transform_1(%arg0: i32, %arg1: i32) -> (i32, i32, i32) {
    %c0_i32 = arith.constant 0 : i32
    %c0_i32_0 = arith.constant 0 : i32
    %c0_i32_1 = arith.constant 0 : i32
    %c0_i32_2 = arith.constant 0 : i32
    return %c0_i32, %c0_i32_0, %c0_i32_1 : i32, i32, i32
  }
  func.func @transform_2(%arg0: i32, %arg1: i32) -> (i32, i32, i32) {
    %c0_i32 = arith.constant 0 : i32
    %c0_i32_0 = arith.constant 0 : i32
    %c0_i32_1 = arith.constant 0 : i32
    return %arg0, %c0_i32, %c0_i32_0 : i32, i32, i32
  }
}

module attributes {stable_mosaic.version = 11 : i64} {
  func.func @_apply_kernel(%arg0: i32, %arg1: memref<1x8x384xbf16, #tpu.memory_space<vmem>>, %arg2: memref<9x8x8xbf16, #tpu.memory_space<vmem>>, %arg3: memref<8x1xf32, #tpu.memory_space<vmem>>, %arg4: memref<8x1xf32, #tpu.memory_space<vmem>>, %arg5: memref<1x8x288xf32, #tpu.memory_space<vmem>>) attributes {dimension_semantics = [#tpu.dimension_semantics<parallel>], iteration_bounds = array<i64: 2>, scalar_prefetch = 0 : i64, scratch_operands = 0 : i64, tpu.core_type = #tpu.core_type<tc>, window_params = [{transform_indices = @transform_0, window_bounds = array<i64: 1, 8, 384>}, {pipeline_mode = #tpu.pipeline_mode<synchronous>, transform_indices = @transform_1, window_bounds = array<i64: 9, 8, 8>}, {pipeline_mode = #tpu.pipeline_mode<synchronous>, transform_indices = @transform_2, window_bounds = array<i64: 8, 1>}, {pipeline_mode = #tpu.pipeline_mode<synchronous>, transform_indices = @transform_3, window_bounds = array<i64: 8, 1>}, {transform_indices = @transform_4, window_bounds = array<i64: 1, 8, 288>}]} {
    %c0 = arith.constant 0 : index
    %c0_0 = arith.constant 0 : index
    %c0_1 = arith.constant 0 : index
    %0 = vector.load %arg1[%c0, %c0_0, %c0_1] : memref<1x8x384xbf16, #tpu.memory_space<vmem>>, vector<1x8x288xbf16>
    %1 = vector.shape_cast %0 : vector<1x8x288xbf16> to vector<8x288xbf16>
    %c0_2 = arith.constant 0 : index
    %c0_3 = arith.constant 0 : index
    %c0_4 = arith.constant 0 : index
    %2 = vector.load %arg2[%c0_2, %c0_3, %c0_4] : memref<9x8x8xbf16, #tpu.memory_space<vmem>>, vector<1x8x8xbf16>
    %3 = vector.shape_cast %2 : vector<1x8x8xbf16> to vector<8x8xbf16>
    %cst = arith.constant dense<0.000000e+00> : vector<8x288xf32>
    %4 = tpu.matmul %3, %1, %cst {dimension_numbers = #tpu.dot_dimension_numbers<[1], [0], [0], [1], [0, 0, 1, 1], [], []>} : vector<8x8xbf16>, vector<8x288xbf16>, vector<8x288xf32> -> vector<8x288xf32>
    %c0_5 = arith.constant 0 : index
    %c0_6 = arith.constant 0 : index
    %c1 = arith.constant 1 : index
    %5 = vector.load %arg1[%c0_5, %c0_6, %c1] : memref<1x8x384xbf16, #tpu.memory_space<vmem>>, vector<1x8x288xbf16>
    %6 = vector.shape_cast %5 : vector<1x8x288xbf16> to vector<8x288xbf16>
    %c1_7 = arith.constant 1 : index
    %c0_8 = arith.constant 0 : index
    %c0_9 = arith.constant 0 : index
    %7 = vector.load %arg2[%c1_7, %c0_8, %c0_9] : memref<9x8x8xbf16, #tpu.memory_space<vmem>>, vector<1x8x8xbf16>
    %8 = vector.shape_cast %7 : vector<1x8x8xbf16> to vector<8x8xbf16>
    %cst_10 = arith.constant dense<0.000000e+00> : vector<8x288xf32>
    %9 = tpu.matmul %8, %6, %cst_10 {dimension_numbers = #tpu.dot_dimension_numbers<[1], [0], [0], [1], [0, 0, 1, 1], [], []>} : vector<8x8xbf16>, vector<8x288xbf16>, vector<8x288xf32> -> vector<8x288xf32>
    %10 = arith.addf %4, %9 : vector<8x288xf32>
    %c0_11 = arith.constant 0 : index
    %c0_12 = arith.constant 0 : index
    %c2 = arith.constant 2 : index
    %11 = vector.load %arg1[%c0_11, %c0_12, %c2] : memref<1x8x384xbf16, #tpu.memory_space<vmem>>, vector<1x8x288xbf16>
    %12 = vector.shape_cast %11 : vector<1x8x288xbf16> to vector<8x288xbf16>
    %c2_13 = arith.constant 2 : index
    %c0_14 = arith.constant 0 : index
    %c0_15 = arith.constant 0 : index
    %13 = vector.load %arg2[%c2_13, %c0_14, %c0_15] : memref<9x8x8xbf16, #tpu.memory_space<vmem>>, vector<1x8x8xbf16>
    %14 = vector.shape_cast %13 : vector<1x8x8xbf16> to vector<8x8xbf16>
    %cst_16 = arith.constant dense<0.000000e+00> : vector<8x288xf32>
    %15 = tpu.matmul %14, %12, %cst_16 {dimension_numbers = #tpu.dot_dimension_numbers<[1], [0], [0], [1], [0, 0, 1, 1], [], []>} : vector<8x8xbf16>, vector<8x288xbf16>, vector<8x288xf32> -> vector<8x288xf32>
    %16 = arith.addf %10, %15 : vector<8x288xf32>
    %c0_17 = arith.constant 0 : index
    %c0_18 = arith.constant 0 : index
    %c18 = arith.constant 18 : index
    %17 = vector.load %arg1[%c0_17, %c0_18, %c18] : memref<1x8x384xbf16, #tpu.memory_space<vmem>>, vector<1x8x288xbf16>
    %18 = vector.shape_cast %17 : vector<1x8x288xbf16> to vector<8x288xbf16>
    %c3 = arith.constant 3 : index
    %c0_19 = arith.constant 0 : index
    %c0_20 = arith.constant 0 : index
    %19 = vector.load %arg2[%c3, %c0_19, %c0_20] : memref<9x8x8xbf16, #tpu.memory_space<vmem>>, vector<1x8x8xbf16>
    %20 = vector.shape_cast %19 : vector<1x8x8xbf16> to vector<8x8xbf16>
    %cst_21 = arith.constant dense<0.000000e+00> : vector<8x288xf32>
    %21 = tpu.matmul %20, %18, %cst_21 {dimension_numbers = #tpu.dot_dimension_numbers<[1], [0], [0], [1], [0, 0, 1, 1], [], []>} : vector<8x8xbf16>, vector<8x288xbf16>, vector<8x288xf32> -> vector<8x288xf32>
    %22 = arith.addf %16, %21 : vector<8x288xf32>
    %c0_22 = arith.constant 0 : index
    %c0_23 = arith.constant 0 : index
    %c19 = arith.constant 19 : index
    %23 = vector.load %arg1[%c0_22, %c0_23, %c19] : memref<1x8x384xbf16, #tpu.memory_space<vmem>>, vector<1x8x288xbf16>
    %24 = vector.shape_cast %23 : vector<1x8x288xbf16> to vector<8x288xbf16>
    %c4 = arith.constant 4 : index
    %c0_24 = arith.constant 0 : index
    %c0_25 = arith.constant 0 : index
    %25 = vector.load %arg2[%c4, %c0_24, %c0_25] : memref<9x8x8xbf16, #tpu.memory_space<vmem>>, vector<1x8x8xbf16>
    %26 = vector.shape_cast %25 : vector<1x8x8xbf16> to vector<8x8xbf16>
    %cst_26 = arith.constant dense<0.000000e+00> : vector<8x288xf32>
    %27 = tpu.matmul %26, %24, %cst_26 {dimension_numbers = #tpu.dot_dimension_numbers<[1], [0], [0], [1], [0, 0, 1, 1], [], []>} : vector<8x8xbf16>, vector<8x288xbf16>, vector<8x288xf32> -> vector<8x288xf32>
    %28 = arith.addf %22, %27 : vector<8x288xf32>
    %c0_27 = arith.constant 0 : index
    %c0_28 = arith.constant 0 : index
    %c20 = arith.constant 20 : index
    %29 = vector.load %arg1[%c0_27, %c0_28, %c20] : memref<1x8x384xbf16, #tpu.memory_space<vmem>>, vector<1x8x288xbf16>
    %30 = vector.shape_cast %29 : vector<1x8x288xbf16> to vector<8x288xbf16>
    %c5 = arith.constant 5 : index
    %c0_29 = arith.constant 0 : index
    %c0_30 = arith.constant 0 : index
    %31 = vector.load %arg2[%c5, %c0_29, %c0_30] : memref<9x8x8xbf16, #tpu.memory_space<vmem>>, vector<1x8x8xbf16>
    %32 = vector.shape_cast %31 : vector<1x8x8xbf16> to vector<8x8xbf16>
    %cst_31 = arith.constant dense<0.000000e+00> : vector<8x288xf32>
    %33 = tpu.matmul %32, %30, %cst_31 {dimension_numbers = #tpu.dot_dimension_numbers<[1], [0], [0], [1], [0, 0, 1, 1], [], []>} : vector<8x8xbf16>, vector<8x288xbf16>, vector<8x288xf32> -> vector<8x288xf32>
    %34 = arith.addf %28, %33 : vector<8x288xf32>
    %c0_32 = arith.constant 0 : index
    %c0_33 = arith.constant 0 : index
    %c36 = arith.constant 36 : index
    %35 = vector.load %arg1[%c0_32, %c0_33, %c36] : memref<1x8x384xbf16, #tpu.memory_space<vmem>>, vector<1x8x288xbf16>
    %36 = vector.shape_cast %35 : vector<1x8x288xbf16> to vector<8x288xbf16>
    %c6 = arith.constant 6 : index
    %c0_34 = arith.constant 0 : index
    %c0_35 = arith.constant 0 : index
    %37 = vector.load %arg2[%c6, %c0_34, %c0_35] : memref<9x8x8xbf16, #tpu.memory_space<vmem>>, vector<1x8x8xbf16>
    %38 = vector.shape_cast %37 : vector<1x8x8xbf16> to vector<8x8xbf16>
    %cst_36 = arith.constant dense<0.000000e+00> : vector<8x288xf32>
    %39 = tpu.matmul %38, %36, %cst_36 {dimension_numbers = #tpu.dot_dimension_numbers<[1], [0], [0], [1], [0, 0, 1, 1], [], []>} : vector<8x8xbf16>, vector<8x288xbf16>, vector<8x288xf32> -> vector<8x288xf32>
    %40 = arith.addf %34, %39 : vector<8x288xf32>
    %c0_37 = arith.constant 0 : index
    %c0_38 = arith.constant 0 : index
    %c37 = arith.constant 37 : index
    %41 = vector.load %arg1[%c0_37, %c0_38, %c37] : memref<1x8x384xbf16, #tpu.memory_space<vmem>>, vector<1x8x288xbf16>
    %42 = vector.shape_cast %41 : vector<1x8x288xbf16> to vector<8x288xbf16>
    %c7 = arith.constant 7 : index
    %c0_39 = arith.constant 0 : index
    %c0_40 = arith.constant 0 : index
    %43 = vector.load %arg2[%c7, %c0_39, %c0_40] : memref<9x8x8xbf16, #tpu.memory_space<vmem>>, vector<1x8x8xbf16>
    %44 = vector.shape_cast %43 : vector<1x8x8xbf16> to vector<8x8xbf16>
    %cst_41 = arith.constant dense<0.000000e+00> : vector<8x288xf32>
    %45 = tpu.matmul %44, %42, %cst_41 {dimension_numbers = #tpu.dot_dimension_numbers<[1], [0], [0], [1], [0, 0, 1, 1], [], []>} : vector<8x8xbf16>, vector<8x288xbf16>, vector<8x288xf32> -> vector<8x288xf32>
    %46 = arith.addf %40, %45 : vector<8x288xf32>
    %c0_42 = arith.constant 0 : index
    %c0_43 = arith.constant 0 : index
    %c38 = arith.constant 38 : index
    %47 = vector.load %arg1[%c0_42, %c0_43, %c38] : memref<1x8x384xbf16, #tpu.memory_space<vmem>>, vector<1x8x288xbf16>
    %48 = vector.shape_cast %47 : vector<1x8x288xbf16> to vector<8x288xbf16>
    %c8 = arith.constant 8 : index
    %c0_44 = arith.constant 0 : index
    %c0_45 = arith.constant 0 : index
    %49 = vector.load %arg2[%c8, %c0_44, %c0_45] : memref<9x8x8xbf16, #tpu.memory_space<vmem>>, vector<1x8x8xbf16>
    %50 = vector.shape_cast %49 : vector<1x8x8xbf16> to vector<8x8xbf16>
    %cst_46 = arith.constant dense<0.000000e+00> : vector<8x288xf32>
    %51 = tpu.matmul %50, %48, %cst_46 {dimension_numbers = #tpu.dot_dimension_numbers<[1], [0], [0], [1], [0, 0, 1, 1], [], []>} : vector<8x8xbf16>, vector<8x288xbf16>, vector<8x288xf32> -> vector<8x288xf32>
    %52 = arith.addf %46, %51 : vector<8x288xf32>
    %c0_47 = arith.constant 0 : index
    %c0_48 = arith.constant 0 : index
    %53 = vector.load %arg3[%c0_47, %c0_48] : memref<8x1xf32, #tpu.memory_space<vmem>>, vector<8x1xf32>
    %54 = vector.broadcast %53 : vector<8x1xf32> to vector<8x288xf32>
    %55 = arith.mulf %52, %54 : vector<8x288xf32>
    %c0_49 = arith.constant 0 : index
    %c0_50 = arith.constant 0 : index
    %56 = vector.load %arg4[%c0_49, %c0_50] : memref<8x1xf32, #tpu.memory_space<vmem>>, vector<8x1xf32>
    %57 = vector.broadcast %56 : vector<8x1xf32> to vector<8x288xf32>
    %58 = arith.addf %55, %57 : vector<8x288xf32>
    %cst_51 = arith.constant 0.000000e+00 : f32
    %59 = vector.broadcast %cst_51 : f32 to vector<8x288xf32>
    %60 = arith.cmpf ogt, %58, %59 : vector<8x288xf32>
    %cst_52 = arith.constant 0.00999999977 : f32
    %61 = vector.broadcast %cst_52 : f32 to vector<8x288xf32>
    %62 = arith.mulf %61, %58 : vector<8x288xf32>
    %63 = arith.select %60, %58, %62 : vector<8x288xi1>, vector<8x288xf32>
    %c0_53 = arith.constant 0 : index
    %c0_54 = arith.constant 0 : index
    %c0_55 = arith.constant 0 : index
    %64 = vector.load %arg5[%c0_53, %c0_54, %c0_55] : memref<1x8x288xf32, #tpu.memory_space<vmem>>, vector<1x8x288xf32>
    %65 = vector.shape_cast %64 : vector<1x8x288xf32> to vector<8x288xf32>
    %66 = vector.shape_cast %63 : vector<8x288xf32> to vector<1x8x288xf32>
    tpu.vector_store %arg5[%c0_53, %c0_54, %c0_55], %66 {strides = array<i32>} : memref<1x8x288xf32, #tpu.memory_space<vmem>>, vector<1x8x288xf32>,
    return
  }
  func.func @transform_0(%arg0: i32) -> (i32, i32, i32) {
    %c0_i32 = arith.constant 0 : i32
    %c0_i32_0 = arith.constant 0 : i32
    %c0_i32_1 = arith.constant 0 : i32
    return %arg0, %c0_i32, %c0_i32_0 : i32, i32, i32
  }
  func.func @transform_1(%arg0: i32) -> (i32, i32, i32) {
    %c0_i32 = arith.constant 0 : i32
    %c0_i32_0 = arith.constant 0 : i32
    %c0_i32_1 = arith.constant 0 : i32
    %c0_i32_2 = arith.constant 0 : i32
    return %c0_i32, %c0_i32_0, %c0_i32_1 : i32, i32, i32
  }
  func.func @transform_2(%arg0: i32) -> (i32, i32) {
    %c0_i32 = arith.constant 0 : i32
    %c0_i32_0 = arith.constant 0 : i32
    %c0_i32_1 = arith.constant 0 : i32
    return %c0_i32, %c0_i32_0 : i32, i32
  }
  func.func @transform_3(%arg0: i32) -> (i32, i32) {
    %c0_i32 = arith.constant 0 : i32
    %c0_i32_0 = arith.constant 0 : i32
    %c0_i32_1 = arith.constant 0 : i32
    return %c0_i32, %c0_i32_0 : i32, i32
  }
  func.func @transform_4(%arg0: i32) -> (i32, i32, i32) {
    %c0_i32 = arith.constant 0 : i32
    %c0_i32_0 = arith.constant 0 : i32
    %c0_i32_1 = arith.constant 0 : i32
    return %arg0, %c0_i32, %c0_i32_0 : i32, i32, i32
  }
}

</mosaic_0001>

<llo_original>
// kernel: conv_single_forward.3
$region0: #{conv_single_forward.3}
  #allocation0 [shape = 'u32[]', space=smem, size = 0x4, offset = 0x4, fixed_abs, tag = 'smem constant byte address 0x4 - core index']
  #allocation1 [shape = 'u32[72,128]{1,0:T(1,128)}', space=vmem, size = 0x9000, scoped, tag = 'internal scratch']
  %s0 = inlined_call_operand.vmem [shape: bf16[2,8,384], index: 0, kind: input, shape index: {}]
  %s1 = inlined_call_operand.vmem [shape: bf16[9,8,8], index: 1, kind: input, shape index: {}]
  %s2 = inlined_call_operand.vmem [shape: f32[8,1], index: 2, kind: input, shape index: {}]
  %s3 = inlined_call_operand.vmem [shape: f32[8,1], index: 3, kind: input, shape index: {}]
  %s4 = inlined_call_operand.vmem [shape: f32[2,8,288], index: 4, kind: output, shape index: {}]
  %s5 = sld [smem:[#allocation0]]
  $region49: #{conv_single_forward.3} parent=0
    _
  %s7 = ssub.s32 1, %s5
  %s8 = scalar_select 0, %s7, %s5
  loop: start=0, step=1, limit=4
  $region2: #{conv_single_forward.3} parent=0 // loop_pre_header
    _
  $region3: #{conv_single_forward.3} parent=0 // loop_header
    %s10 = sphi 0, %s14
    %p11 = scmp.ge.s32.totalorder %s10, 4
    %s20 = sphi 0, %s22
    %s23 = sphi 0, %s20
    %s24 = sphi 0, %s23
    %s40 = sphi 0, %s24
    %s44 = sphi 0, %s44
    %s46 = sphi 0, %s44
    %s47 = sphi 0, %s46
    %s61 = sphi 0, %s47
    %s65 = sphi 0, %s65
    %s67 = sphi 0, %s65
    %s68 = sphi 0, %s67
    %s82 = sphi 0, %s68
    %s86 = sphi 0, %s86
    %s88 = sphi 0, %s86
    %s89 = sphi 0, %s88
    %s103 = sphi 0, %s89
    %s109 = sphi 0, %s111
    %s112 = sphi 0, %s109
    %s113 = sphi 0, %s112
    %s129 = sphi 0, %s113
  $region4: #{conv_single_forward.3} parent=0 // loop_header_branch
    %13 = sbr.rel (%p11) target = $region8
  $region5: #{conv_single_forward.3} parent=0 // loop_body
    %s15 = ssub.s32 %s10, 1
    %s16 = ssub.s32 %s10, 2
    %s17 = sadd.s32 %s10, 1
    %s18 = ssub.s32 %s10, %s17
    %p19 = scmp.eq.s32.totalorder %s18, 0
    %s21 = sadd.s32 %s20, 1
    %s22 = scalar_select %p19, %s20, %s21
    %p25 = pneg %p19
    %p26 = scmp.eq.s32.totalorder %s10, 1
    %p27 = por %p25, %p26
    %p28 = scmp.ne.s32.totalorder %s20, %s23
    %p29 = scmp.eq.s32.totalorder %s10, 0
    %p30 = por %p28, %p29
    %p31 = scmp.ne.s32.totalorder %s20, %s23
    %p32 = scmp.eq.s32.totalorder %s15, 1
    %p33 = por %p31, %p32
    %p34 = scmp.ne.s32.totalorder %s23, %s24
    %p35 = scmp.eq.s32.totalorder %s15, 0
    %p36 = por %p34, %p35
    %p37 = scmp.ne.s32.totalorder %s23, %s24
    %p38 = scmp.eq.s32.totalorder %s16, 1
    %p39 = por %p37, %p38
    %p41 = scmp.ne.s32.totalorder %s24, %s40
    %p42 = scmp.eq.s32.totalorder %s16, 0
    %p43 = por %p41, %p42
    %s45 = sadd.s32 %s44, 1
    %p48 = scmp.eq.s32.totalorder %s10, 1
    %p49 = scmp.ne.s32.totalorder %s44, %s46
    %p50 = scmp.eq.s32.totalorder %s10, 0
    %p51 = por %p49, %p50
    %p52 = scmp.ne.s32.totalorder %s44, %s46
    %p53 = scmp.eq.s32.totalorder %s15, 1
    %p54 = por %p52, %p53
    %p55 = scmp.ne.s32.totalorder %s46, %s47
    %p56 = scmp.eq.s32.totalorder %s15, 0
    %p57 = por %p55, %p56
    %p58 = scmp.ne.s32.totalorder %s46, %s47
    %p59 = scmp.eq.s32.totalorder %s16, 1
    %p60 = por %p58, %p59
    %p62 = scmp.ne.s32.totalorder %s47, %s61
    %p63 = scmp.eq.s32.totalorder %s16, 0
    %p64 = por %p62, %p63
    %s66 = sadd.s32 %s65, 1
    %p69 = scmp.eq.s32.totalorder %s10, 1
    %p70 = scmp.ne.s32.totalorder %s65, %s67
    %p71 = scmp.eq.s32.totalorder %s10, 0
    %p72 = por %p70, %p71
    %p73 = scmp.ne.s32.totalorder %s65, %s67
    %p74 = scmp.eq.s32.totalorder %s15, 1
    %p75 = por %p73, %p74
    %p76 = scmp.ne.s32.totalorder %s67, %s68
    %p77 = scmp.eq.s32.totalorder %s15, 0
    %p78 = por %p76, %p77
    %p79 = scmp.ne.s32.totalorder %s67, %s68
    %p80 = scmp.eq.s32.totalorder %s16, 1
    %p81 = por %p79, %p80
    %p83 = scmp.ne.s32.totalorder %s68, %s82
    %p84 = scmp.eq.s32.totalorder %s16, 0
    %p85 = por %p83, %p84
    %s87 = sadd.s32 %s86, 1
    %p90 = scmp.eq.s32.totalorder %s10, 1
    %p91 = scmp.ne.s32.totalorder %s86, %s88
    %p92 = scmp.eq.s32.totalorder %s10, 0
    %p93 = por %p91, %p92
    %p94 = scmp.ne.s32.totalorder %s86, %s88
    %p95 = scmp.eq.s32.totalorder %s15, 1
    %p96 = por %p94, %p95
    %p97 = scmp.ne.s32.totalorder %s88, %s89
    %p98 = scmp.eq.s32.totalorder %s15, 0
    %p99 = por %p97, %p98
    %p100 = scmp.ne.s32.totalorder %s88, %s89
    %p101 = scmp.eq.s32.totalorder %s16, 1
    %p102 = por %p100, %p101
    %p104 = scmp.ne.s32.totalorder %s89, %s103
    %p105 = scmp.eq.s32.totalorder %s16, 0
    %p106 = por %p104, %p105
    %s107 = ssub.s32 %s10, %s17
    %p108 = scmp.eq.s32.totalorder %s107, 0
    %s110 = sadd.s32 %s109, 1
    %s111 = scalar_select %p108, %s109, %s110
    %p114 = pneg %p108
    %p115 = scmp.eq.s32.totalorder %s10, 1
    %p116 = por %p114, %p115
    %p117 = scmp.ne.s32.totalorder %s109, %s112
    %p118 = scmp.eq.s32.totalorder %s10, 0
    %p119 = por %p117, %p118
    %p120 = scmp.ne.s32.totalorder %s109, %s112
    %p121 = scmp.eq.s32.totalorder %s15, 1
    %p122 = por %p120, %p121
    %p123 = scmp.ne.s32.totalorder %s112, %s113
    %p124 = scmp.eq.s32.totalorder %s15, 0
    %p125 = por %p123, %p124
    %p126 = scmp.ne.s32.totalorder %s112, %s113
    %p127 = scmp.eq.s32.totalorder %s16, 1
    %p128 = por %p126, %p127
    %p130 = scmp.ne.s32.totalorder %s113, %s129
    %p131 = scmp.eq.s32.totalorder %s16, 0
    %p132 = por %p130, %p131
    %p133 = scmp.le.s32.totalorder 1, %s10
    %p134 = scmp.lt.s32.totalorder %s10, 3
    %p135 = pnand %p133, %p134
    %p136 = pneg %p135
    // Predicated region
    $region9: #{conv_single_forward.3} parent=5 // pred_check
      _
    $region10: #{conv_single_forward.3} parent=5 // pred_check_branch
      %138 = sbr.rel (%p135) target = $region12
    $region11: #{conv_single_forward.3} parent=5 // pred_region
      %s139 = ssub.s32 %s10, 1
      // Predicated region
      $region13: #{conv_single_forward.3} parent=11 // pred_check
        %p140 = pneg %p57
      $region14: #{conv_single_forward.3} parent=11 // pred_check_branch
        %142 = sbr.rel (%p140) target = $region16
      $region15: #{conv_single_forward.3} parent=11 // pred_region
        _
      $region16: #{conv_single_forward.3} parent=11 // pred_fallthru
        _
      // Predicated region
      $region17: #{conv_single_forward.3} parent=11 // pred_check
        %p143 = pneg %p78
      $region18: #{conv_single_forward.3} parent=11 // pred_check_branch
        %145 = sbr.rel (%p143) target = $region20
      $region19: #{conv_single_forward.3} parent=11 // pred_region
        _
      $region20: #{conv_single_forward.3} parent=11 // pred_fallthru
        _
      // Predicated region
      $region21: #{conv_single_forward.3} parent=11 // pred_check
        %p146 = pneg %p99
      $region22: #{conv_single_forward.3} parent=11 // pred_check_branch
        %148 = sbr.rel (%p146) target = $region24
      $region23: #{conv_single_forward.3} parent=11 // pred_region
        _
      $region24: #{conv_single_forward.3} parent=11 // pred_fallthru
        _
    $region12: #{conv_single_forward.3} parent=5 // pred_fallthru
      _
    %p149 = scmp.lt.s32.totalorder %s10, 2
    // Predicated region
    $region25: #{conv_single_forward.3} parent=5 // pred_check
      %p150 = pneg %p149
    $region26: #{conv_single_forward.3} parent=5 // pred_check_branch
      %152 = sbr.rel (%p150) target = $region28
    $region27: #{conv_single_forward.3} parent=5 // pred_region
      // Predicated region
      $region29: #{conv_single_forward.3} parent=27 // pred_check
        %p153 = pneg %p30
      $region30: #{conv_single_forward.3} parent=27 // pred_check_branch
        %155 = sbr.rel (%p153) target = $region32
      $region31: #{conv_single_forward.3} parent=27 // pred_region
        %p156 = scmp.lt.s32.totalorder %s10, 1
        %s157 = scalar_select %p156, %s10, 1
        %s158 = smul.addr %s157, 3
        %s159 = smul.addr %s158, 4
        %s160 = scalar_lea.vmem %s0, %s159
      $region32: #{conv_single_forward.3} parent=27 // pred_fallthru
        _
    $region28: #{conv_single_forward.3} parent=5 // pred_fallthru
      _
    %p161 = scmp.le.s32.totalorder 1, %s10
    %p162 = scmp.lt.s32.totalorder %s10, 3
    %p163 = pnand %p161, %p162
    %p164 = pneg %p163
    // Predicated region
    $region33: #{conv_single_forward.3} parent=5 // pred_check
      _
    $region34: #{conv_single_forward.3} parent=5 // pred_check_branch
      %166 = sbr.rel (%p163) target = $region36
    $region35: #{conv_single_forward.3} parent=5 // pred_region
      %s167 = ssub.s32 %s10, 1
      %p168 = scmp.lt.s32.totalorder %s15, 1
      %s169 = scalar_select %p168, %s15, 1
      %s170 = smul.addr %s169, 3
      %s171 = smul.addr %s170, 4
      %s172 = scalar_lea.vmem %s0, %s171
      %p173 = pneg %p36
      %p174 = pneg %p33
      %p175 = pneg %p57
      %p176 = pneg %p54
      %p177 = pneg %p78
      %p178 = pneg %p75
      %p179 = pneg %p99
      %p180 = pneg %p96
      %p181 = pneg %p125
      %p182 = pneg %p122
      %p183 = scmp.lt.s32.totalorder %s15, 1
      %s184 = scalar_select %p183, %s15, 1
      %s185 = smul.addr %s184, 3
      %s186 = smul.addr %s185, 8
      %s187 = scalar_lea.vmem %s4, %s186
      %p188 = scmp.lt.s32.totalorder %s15, 1
      %s189 = scalar_select %p188, %s15, 1
      %s190 = smul.addr %s189, 3
      %s191 = smul.addr %s190, 4
      %s192 = scalar_lea.vmem %s0, %s191
      %p193 = scmp.lt.s32.totalorder %s15, 1
      %s194 = scalar_select %p193, %s15, 1
      %s195 = smul.addr %s194, 3
      %s196 = smul.addr %s195, 8
      %s197 = scalar_lea.vmem %s4, %s196
      %v199 = vld [vmem:[%s192] sm:$0xff]
      %v200 = vld [vmem:[%s192 + $0x8] sm:$0xf]
      %v201 = vld [vmem:[%s1] sm:$0xf]
      %s202 = scalar_lea.vmem %s1, 4
      %v203 = vld [vmem:[%s202] sm:$0xf]
      %v206 = vunpack.c.l.b16 %v199
      %v207 = vunpack.c.h.b16 %v199
      %v208 = vunpack.c.l.b16 %v200
      %v209 = vpack.c.b16 %v206, %v206
      %v210 = vpack.c.b16 %v207, %v207
      %v211 = vpack.c.b16 %v208, %v208
      %212 = vrot.lane.b32.xlu0 %v209, 127
      %v213 = vpop.permute.xlu0 %212
      %214 = vrot.lane.b32.xlu0 %v210, 127
      %v215 = vpop.permute.xlu0 %214
      %216 = vrot.lane.b32.xlu0 %v211, 127
      %v217 = vpop.permute.xlu0 %216
      %vm218 = vcmask 1039360
      %v219 = vsel %vm218, %v213, %v215
      %v220 = vsel %vm218, %v215, %v217
      %vm221 = vcmask 64512
      %v223 = vsel %vm221, %v203, 0
      %vm225 = vcmask 1043456
      %v227 = vsel %vm225, %v219, 0
      %v230 = vsel %vm225, %v220, 0
      %v233 = vsel %vm225, %v217, 0
      %235 = vmatpush.bf16.msra.mxu0 0
      %236 = vmatpush.bf16.msra.mxu0 0
      %237 = vmatpush.bf16.msra.mxu0 0
      %238 = vmatpush.bf16.msra.mxu0 0
      %239 = vmatpush.bf16.msra.mxu0 0
      %240 = vmatpush.bf16.msra.mxu0 0
      %241 = vmatpush.bf16.msra.mxu0 0
      %242 = vmatpush.bf16.msra.mxu0 %v227
      %243 = vmatmul.bf16.gmra.mxu0 %v223
      %v244 = vpop.f32.mrf.mxu0
      %v245 = vadd.f32 0.0, %v244
      %v246 = vpop.f32.mrf.mxu0
      %247 = vdwg.mxu0
      %248 = vmatpush.bf16.msra.mxu0 0
      %249 = vmatpush.bf16.msra.mxu0 0
      %250 = vmatpush.bf16.msra.mxu0 0
      %251 = vmatpush.bf16.msra.mxu0 0
      %252 = vmatpush.bf16.msra.mxu0 0
      %253 = vmatpush.bf16.msra.mxu0 0
      %254 = vmatpush.bf16.msra.mxu0 0
      %255 = vmatpush.bf16.msra.mxu0 %v230
      %256 = vmatmul.bf16.gmra.mxu0 %v223
      %v257 = vpop.f32.mrf.mxu0
      %v258 = vadd.f32 0.0, %v257
      %v259 = vpop.f32.mrf.mxu0
      %260 = vdwg.mxu0
      %261 = vmatpush.bf16.msra.mxu0 0
      %262 = vmatpush.bf16.msra.mxu0 0
      %263 = vmatpush.bf16.msra.mxu0 0
      %264 = vmatpush.bf16.msra.mxu0 0
      %265 = vmatpush.bf16.msra.mxu0 0
      %266 = vmatpush.bf16.msra.mxu0 0
      %267 = vmatpush.bf16.msra.mxu0 0
      %268 = vmatpush.bf16.msra.mxu0 %v233
      %269 = vmatmul.bf16.gmra.mxu0 %v223
      %v270 = vpop.f32.mrf.mxu0
      %v271 = vadd.f32 0.0, %v270
      %v272 = vpop.f32.mrf.mxu0
      %273 = vdwg.mxu0
      %v275 = vsel %vm221, %v201, 0
      %v278 = vsel %vm225, %v209, 0
      %v281 = vsel %vm225, %v210, 0
      %v284 = vsel %vm225, %v211, 0
      %286 = vmatpush.bf16.msra.mxu0 0
      %287 = vmatpush.bf16.msra.mxu0 0
      %288 = vmatpush.bf16.msra.mxu0 0
      %289 = vmatpush.bf16.msra.mxu0 0
      %290 = vmatpush.bf16.msra.mxu0 0
      %291 = vmatpush.bf16.msra.mxu0 0
      %292 = vmatpush.bf16.msra.mxu0 0
      %293 = vmatpush.bf16.msra.mxu0 %v278
      %294 = vmatmul.bf16.gmra.mxu0 %v275
      %v295 = vpop.f32.mrf.mxu0
      %v296 = vadd.f32 %v245, %v295
      %v297 = vpop.f32.mrf.mxu0
      %298 = vdwg.mxu0
      %299 = vmatpush.bf16.msra.mxu0 0
      %300 = vmatpush.bf16.msra.mxu0 0
      %301 = vmatpush.bf16.msra.mxu0 0
      %302 = vmatpush.bf16.msra.mxu0 0
      %303 = vmatpush.bf16.msra.mxu0 0
      %304 = vmatpush.bf16.msra.mxu0 0
      %305 = vmatpush.bf16.msra.mxu0 0
      %306 = vmatpush.bf16.msra.mxu0 %v281
      %307 = vmatmul.bf16.gmra.mxu0 %v275
      %v308 = vpop.f32.mrf.mxu0
      %v309 = vadd.f32 %v258, %v308
      %v310 = vpop.f32.mrf.mxu0
      %311 = vdwg.mxu0
      %312 = vmatpush.bf16.msra.mxu0 0
      %313 = vmatpush.bf16.msra.mxu0 0
      %314 = vmatpush.bf16.msra.mxu0 0
      %315 = vmatpush.bf16.msra.mxu0 0
      %316 = vmatpush.bf16.msra.mxu0 0
      %317 = vmatpush.bf16.msra.mxu0 0
      %318 = vmatpush.bf16.msra.mxu0 0
      %319 = vmatpush.bf16.msra.mxu0 %v284
      %320 = vmatmul.bf16.gmra.mxu0 %v275
      %v321 = vpop.f32.mrf.mxu0
      %v322 = vadd.f32 %v271, %v321
      %v323 = vpop.f32.mrf.mxu0
      %324 = vdwg.mxu0
      %s325 = scalar_lea.vmem %s1, 8
      %v326 = vld [vmem:[%s325] sm:$0xf]
      %327 = vrot.lane.b32.xlu0 %v209, 126
      %v328 = vpop.permute.xlu0 %327
      %329 = vrot.lane.b32.xlu0 %v210, 126
      %v330 = vpop.permute.xlu0 %329
      %331 = vrot.lane.b32.xlu0 %v211, 126
      %v332 = vpop.permute.xlu0 %331
      %vm333 = vcmask 1031168
      %v334 = vsel %vm333, %v328, %v330
      %v335 = vsel %vm333, %v330, %v332
      %v337 = vsel %vm221, %v326, 0
      %v340 = vsel %vm225, %v334, 0
      %v343 = vsel %vm225, %v335, 0
      %v346 = vsel %vm225, %v332, 0
      %348 = vmatpush.bf16.msra.mxu0 0
      %349 = vmatpush.bf16.msra.mxu0 0
      %350 = vmatpush.bf16.msra.mxu0 0
      %351 = vmatpush.bf16.msra.mxu0 0
      %352 = vmatpush.bf16.msra.mxu0 0
      %353 = vmatpush.bf16.msra.mxu0 0
      %354 = vmatpush.bf16.msra.mxu0 0
      %355 = vmatpush.bf16.msra.mxu0 %v340
      %356 = vmatmul.bf16.gmra.mxu0 %v337
      %v357 = vpop.f32.mrf.mxu0
      %v358 = vadd.f32 0.0, %v357
      %v359 = vpop.f32.mrf.mxu0
      %360 = vdwg.mxu0
      %361 = vmatpush.bf16.msra.mxu0 0
      %362 = vmatpush.bf16.msra.mxu0 0
      %363 = vmatpush.bf16.msra.mxu0 0
      %364 = vmatpush.bf16.msra.mxu0 0
      %365 = vmatpush.bf16.msra.mxu0 0
      %366 = vmatpush.bf16.msra.mxu0 0
      %367 = vmatpush.bf16.msra.mxu0 0
      %368 = vmatpush.bf16.msra.mxu0 %v343
      %369 = vmatmul.bf16.gmra.mxu0 %v337
      %v370 = vpop.f32.mrf.mxu0
      %v371 = vadd.f32 0.0, %v370
      %v372 = vpop.f32.mrf.mxu0
      %373 = vdwg.mxu0
      %374 = vmatpush.bf16.msra.mxu0 0
      %375 = vmatpush.bf16.msra.mxu0 0
      %376 = vmatpush.bf16.msra.mxu0 0
      %377 = vmatpush.bf16.msra.mxu0 0
      %378 = vmatpush.bf16.msra.mxu0 0
      %379 = vmatpush.bf16.msra.mxu0 0
      %380 = vmatpush.bf16.msra.mxu0 0
      %381 = vmatpush.bf16.msra.mxu0 %v346
      %382 = vmatmul.bf16.gmra.mxu0 %v337
      %v383 = vpop.f32.mrf.mxu0
      %v384 = vadd.f32 0.0, %v383
      %v385 = vpop.f32.mrf.mxu0
      %386 = vdwg.mxu0
      %v387 = vadd.f32 %v296, %v358
      %v388 = vadd.f32 %v309, %v371
      %v389 = vadd.f32 %v322, %v384
      %s390 = scalar_lea.vmem %s1, 12
      %v391 = vld [vmem:[%s390] sm:$0xf]
      %392 = vrot.lane.b32.xlu0 %v209, 110
      %v393 = vpop.permute.xlu0 %392
      %394 = vrot.lane.b32.xlu0 %v210, 110
      %v395 = vpop.permute.xlu0 %394
      %396 = vrot.lane.b32.xlu0 %v211, 110
      %v397 = vpop.permute.xlu0 %396
      %vm398 = vcmask 900096
      %v399 = vsel %vm398, %v393, %v395
      %v400 = vsel %vm398, %v395, %v397
      %v402 = vsel %vm221, %v391, 0
      %v405 = vsel %vm225, %v399, 0
      %v408 = vsel %vm225, %v400, 0
      %v411 = vsel %vm225, %v397, 0
      %413 = vmatpush.bf16.msra.mxu0 0
      %414 = vmatpush.bf16.msra.mxu0 0
      %415 = vmatpush.bf16.msra.mxu0 0
      %416 = vmatpush.bf16.msra.mxu0 0
      %417 = vmatpush.bf16.msra.mxu0 0
      %418 = vmatpush.bf16.msra.mxu0 0
      %419 = vmatpush.bf16.msra.mxu0 0
      %420 = vmatpush.bf16.msra.mxu0 %v405
      %421 = vmatmul.bf16.gmra.mxu0 %v402
      %v422 = vpop.f32.mrf.mxu0
      %v423 = vadd.f32 0.0, %v422
      %v424 = vpop.f32.mrf.mxu0
      %425 = vdwg.mxu0
      %426 = vmatpush.bf16.msra.mxu0 0
      %427 = vmatpush.bf16.msra.mxu0 0
      %428 = vmatpush.bf16.msra.mxu0 0
      %429 = vmatpush.bf16.msra.mxu0 0
      %430 = vmatpush.bf16.msra.mxu0 0
      %431 = vmatpush.bf16.msra.mxu0 0
      %432 = vmatpush.bf16.msra.mxu0 0
      %433 = vmatpush.bf16.msra.mxu0 %v408
      %434 = vmatmul.bf16.gmra.mxu0 %v402
      %v435 = vpop.f32.mrf.mxu0
      %v436 = vadd.f32 0.0, %v435
      %v437 = vpop.f32.mrf.mxu0
      %438 = vdwg.mxu0
      %439 = vmatpush.bf16.msra.mxu0 0
      %440 = vmatpush.bf16.msra.mxu0 0
      %441 = vmatpush.bf16.msra.mxu0 0
      %442 = vmatpush.bf16.msra.mxu0 0
      %443 = vmatpush.bf16.msra.mxu0 0
      %444 = vmatpush.bf16.msra.mxu0 0
      %445 = vmatpush.bf16.msra.mxu0 0
      %446 = vmatpush.bf16.msra.mxu0 %v411
      %447 = vmatmul.bf16.gmra.mxu0 %v402
      %v448 = vpop.f32.mrf.mxu0
      %v449 = vadd.f32 0.0, %v448
      %v450 = vpop.f32.mrf.mxu0
      %451 = vdwg.mxu0
      %v452 = vadd.f32 %v387, %v423
      %v453 = vadd.f32 %v388, %v436
      %v454 = vadd.f32 %v389, %v449
      %s455 = scalar_lea.vmem %s1, 16
      %v456 = vld [vmem:[%s455] sm:$0xf]
      %457 = vrot.lane.b32.xlu0 %v209, 109
      %v458 = vpop.permute.xlu0 %457
      %459 = vrot.lane.b32.xlu0 %v210, 109
      %v460 = vpop.permute.xlu0 %459
      %461 = vrot.lane.b32.xlu0 %v211, 109
      %v462 = vpop.permute.xlu0 %461
      %vm463 = vcmask 891904
      %v464 = vsel %vm463, %v458, %v460
      %v465 = vsel %vm463, %v460, %v462
      %v467 = vsel %vm221, %v456, 0
      %v470 = vsel %vm225, %v464, 0
      %v473 = vsel %vm225, %v465, 0
      %v476 = vsel %vm225, %v462, 0
      %478 = vmatpush.bf16.msra.mxu0 0
      %479 = vmatpush.bf16.msra.mxu0 0
      %480 = vmatpush.bf16.msra.mxu0 0
      %481 = vmatpush.bf16.msra.mxu0 0
      %482 = vmatpush.bf16.msra.mxu0 0
      %483 = vmatpush.bf16.msra.mxu0 0
      %484 = vmatpush.bf16.msra.mxu0 0
      %485 = vmatpush.bf16.msra.mxu0 %v470
      %486 = vmatmul.bf16.gmra.mxu0 %v467
      %v487 = vpop.f32.mrf.mxu0
      %v488 = vadd.f32 0.0, %v487
      %v489 = vpop.f32.mrf.mxu0
      %490 = vdwg.mxu0
      %491 = vmatpush.bf16.msra.mxu0 0
      %492 = vmatpush.bf16.msra.mxu0 0
      %493 = vmatpush.bf16.msra.mxu0 0
      %494 = vmatpush.bf16.msra.mxu0 0
      %495 = vmatpush.bf16.msra.mxu0 0
      %496 = vmatpush.bf16.msra.mxu0 0
      %497 = vmatpush.bf16.msra.mxu0 0
      %498 = vmatpush.bf16.msra.mxu0 %v473
      %499 = vmatmul.bf16.gmra.mxu0 %v467
      %v500 = vpop.f32.mrf.mxu0
      %v501 = vadd.f32 0.0, %v500
      %v502 = vpop.f32.mrf.mxu0
      %503 = vdwg.mxu0
      %504 = vmatpush.bf16.msra.mxu0 0
      %505 = vmatpush.bf16.msra.mxu0 0
      %506 = vmatpush.bf16.msra.mxu0 0
      %507 = vmatpush.bf16.msra.mxu0 0
      %508 = vmatpush.bf16.msra.mxu0 0
      %509 = vmatpush.bf16.msra.mxu0 0
      %510 = vmatpush.bf16.msra.mxu0 0
      %511 = vmatpush.bf16.msra.mxu0 %v476
      %512 = vmatmul.bf16.gmra.mxu0 %v467
      %v513 = vpop.f32.mrf.mxu0
      %v514 = vadd.f32 0.0, %v513
      %v515 = vpop.f32.mrf.mxu0
      %516 = vdwg.mxu0
      %v517 = vadd.f32 %v452, %v488
      %v518 = vadd.f32 %v453, %v501
      %v519 = vadd.f32 %v454, %v514
      %s520 = scalar_lea.vmem %s1, 20
      %v521 = vld [vmem:[%s520] sm:$0xf]
      %522 = vrot.lane.b32.xlu0 %v209, 108
      %v523 = vpop.permute.xlu0 %522
      %524 = vrot.lane.b32.xlu0 %v210, 108
      %v525 = vpop.permute.xlu0 %524
      %526 = vrot.lane.b32.xlu0 %v211, 108
      %v527 = vpop.permute.xlu0 %526
      %vm528 = vcmask 883712
      %v529 = vsel %vm528, %v523, %v525
      %v530 = vsel %vm528, %v525, %v527
      %v532 = vsel %vm221, %v521, 0
      %v535 = vsel %vm225, %v529, 0
      %v538 = vsel %vm225, %v530, 0
      %v541 = vsel %vm225, %v527, 0
      %543 = vmatpush.bf16.msra.mxu0 0
      %544 = vmatpush.bf16.msra.mxu0 0
      %545 = vmatpush.bf16.msra.mxu0 0
      %546 = vmatpush.bf16.msra.mxu0 0
      %547 = vmatpush.bf16.msra.mxu0 0
      %548 = vmatpush.bf16.msra.mxu0 0
      %549 = vmatpush.bf16.msra.mxu0 0
      %550 = vmatpush.bf16.msra.mxu0 %v535
      %551 = vmatmul.bf16.gmra.mxu0 %v532
      %v552 = vpop.f32.mrf.mxu0
      %v553 = vadd.f32 0.0, %v552
      %v554 = vpop.f32.mrf.mxu0
      %555 = vdwg.mxu0
      %556 = vmatpush.bf16.msra.mxu0 0
      %557 = vmatpush.bf16.msra.mxu0 0
      %558 = vmatpush.bf16.msra.mxu0 0
      %559 = vmatpush.bf16.msra.mxu0 0
      %560 = vmatpush.bf16.msra.mxu0 0
      %561 = vmatpush.bf16.msra.mxu0 0
      %562 = vmatpush.bf16.msra.mxu0 0
      %563 = vmatpush.bf16.msra.mxu0 %v538
      %564 = vmatmul.bf16.gmra.mxu0 %v532
      %v565 = vpop.f32.mrf.mxu0
      %v566 = vadd.f32 0.0, %v565
      %v567 = vpop.f32.mrf.mxu0
      %568 = vdwg.mxu0
      %569 = vmatpush.bf16.msra.mxu0 0
      %570 = vmatpush.bf16.msra.mxu0 0
      %571 = vmatpush.bf16.msra.mxu0 0
      %572 = vmatpush.bf16.msra.mxu0 0
      %573 = vmatpush.bf16.msra.mxu0 0
      %574 = vmatpush.bf16.msra.mxu0 0
      %575 = vmatpush.bf16.msra.mxu0 0
      %576 = vmatpush.bf16.msra.mxu0 %v541
      %577 = vmatmul.bf16.gmra.mxu0 %v532
      %v578 = vpop.f32.mrf.mxu0
      %v579 = vadd.f32 0.0, %v578
      %v580 = vpop.f32.mrf.mxu0
      %581 = vdwg.mxu0
      %v582 = vadd.f32 %v517, %v553
      %v583 = vadd.f32 %v518, %v566
      %v584 = vadd.f32 %v519, %v579
      %s585 = scalar_lea.vmem %s1, 24
      %v586 = vld [vmem:[%s585] sm:$0xf]
      %587 = vrot.lane.b32.xlu0 %v209, 92
      %v588 = vpop.permute.xlu0 %587
      %589 = vrot.lane.b32.xlu0 %v210, 92
      %v590 = vpop.permute.xlu0 %589
      %591 = vrot.lane.b32.xlu0 %v211, 92
      %v592 = vpop.permute.xlu0 %591
      %vm593 = vcmask 752640
      %v594 = vsel %vm593, %v588, %v590
      %v595 = vsel %vm593, %v590, %v592
      %v597 = vsel %vm221, %v586, 0
      %v600 = vsel %vm225, %v594, 0
      %v603 = vsel %vm225, %v595, 0
      %v606 = vsel %vm225, %v592, 0
      %608 = vmatpush.bf16.msra.mxu0 0
      %609 = vmatpush.bf16.msra.mxu0 0
      %610 = vmatpush.bf16.msra.mxu0 0
      %611 = vmatpush.bf16.msra.mxu0 0
      %612 = vmatpush.bf16.msra.mxu0 0
      %613 = vmatpush.bf16.msra.mxu0 0
      %614 = vmatpush.bf16.msra.mxu0 0
      %615 = vmatpush.bf16.msra.mxu0 %v600
      %616 = vmatmul.bf16.gmra.mxu0 %v597
      %v617 = vpop.f32.mrf.mxu0
      %v618 = vadd.f32 0.0, %v617
      %v619 = vpop.f32.mrf.mxu0
      %620 = vdwg.mxu0
      %621 = vmatpush.bf16.msra.mxu0 0
      %622 = vmatpush.bf16.msra.mxu0 0
      %623 = vmatpush.bf16.msra.mxu0 0
      %624 = vmatpush.bf16.msra.mxu0 0
      %625 = vmatpush.bf16.msra.mxu0 0
      %626 = vmatpush.bf16.msra.mxu0 0
      %627 = vmatpush.bf16.msra.mxu0 0
      %628 = vmatpush.bf16.msra.mxu0 %v603
      %629 = vmatmul.bf16.gmra.mxu0 %v597
      %v630 = vpop.f32.mrf.mxu0
      %v631 = vadd.f32 0.0, %v630
      %v632 = vpop.f32.mrf.mxu0
      %633 = vdwg.mxu0
      %634 = vmatpush.bf16.msra.mxu0 0
      %635 = vmatpush.bf16.msra.mxu0 0
      %636 = vmatpush.bf16.msra.mxu0 0
      %637 = vmatpush.bf16.msra.mxu0 0
      %638 = vmatpush.bf16.msra.mxu0 0
      %639 = vmatpush.bf16.msra.mxu0 0
      %640 = vmatpush.bf16.msra.mxu0 0
      %641 = vmatpush.bf16.msra.mxu0 %v606
      %642 = vmatmul.bf16.gmra.mxu0 %v597
      %v643 = vpop.f32.mrf.mxu0
      %v644 = vadd.f32 0.0, %v643
      %v645 = vpop.f32.mrf.mxu0
      %646 = vdwg.mxu0
      %v647 = vadd.f32 %v582, %v618
      %v648 = vadd.f32 %v583, %v631
      %v649 = vadd.f32 %v584, %v644
      %s650 = scalar_lea.vmem %s1, 28
      %v651 = vld [vmem:[%s650] sm:$0xf]
      %652 = vrot.lane.b32.xlu0 %v209, 91
      %v653 = vpop.permute.xlu0 %652
      %654 = vrot.lane.b32.xlu0 %v210, 91
      %v655 = vpop.permute.xlu0 %654
      %656 = vrot.lane.b32.xlu0 %v211, 91
      %v657 = vpop.permute.xlu0 %656
      %vm658 = vcmask 744448
      %v659 = vsel %vm658, %v653, %v655
      %v660 = vsel %vm658, %v655, %v657
      %v662 = vsel %vm221, %v651, 0
      %v665 = vsel %vm225, %v659, 0
      %v668 = vsel %vm225, %v660, 0
      %v671 = vsel %vm225, %v657, 0
      %673 = vmatpush.bf16.msra.mxu0 0
      %674 = vmatpush.bf16.msra.mxu0 0
      %675 = vmatpush.bf16.msra.mxu0 0
      %676 = vmatpush.bf16.msra.mxu0 0
      %677 = vmatpush.bf16.msra.mxu0 0
      %678 = vmatpush.bf16.msra.mxu0 0
      %679 = vmatpush.bf16.msra.mxu0 0
      %680 = vmatpush.bf16.msra.mxu0 %v665
      %681 = vmatmul.bf16.gmra.mxu0 %v662
      %v682 = vpop.f32.mrf.mxu0
      %v683 = vadd.f32 0.0, %v682
      %v684 = vpop.f32.mrf.mxu0
      %685 = vdwg.mxu0
      %686 = vmatpush.bf16.msra.mxu0 0
      %687 = vmatpush.bf16.msra.mxu0 0
      %688 = vmatpush.bf16.msra.mxu0 0
      %689 = vmatpush.bf16.msra.mxu0 0
      %690 = vmatpush.bf16.msra.mxu0 0
      %691 = vmatpush.bf16.msra.mxu0 0
      %692 = vmatpush.bf16.msra.mxu0 0
      %693 = vmatpush.bf16.msra.mxu0 %v668
      %694 = vmatmul.bf16.gmra.mxu0 %v662
      %v695 = vpop.f32.mrf.mxu0
      %v696 = vadd.f32 0.0, %v695
      %v697 = vpop.f32.mrf.mxu0
      %698 = vdwg.mxu0
      %699 = vmatpush.bf16.msra.mxu0 0
      %700 = vmatpush.bf16.msra.mxu0 0
      %701 = vmatpush.bf16.msra.mxu0 0
      %702 = vmatpush.bf16.msra.mxu0 0
      %703 = vmatpush.bf16.msra.mxu0 0
      %704 = vmatpush.bf16.msra.mxu0 0
      %705 = vmatpush.bf16.msra.mxu0 0
      %706 = vmatpush.bf16.msra.mxu0 %v671
      %707 = vmatmul.bf16.gmra.mxu0 %v662
      %v708 = vpop.f32.mrf.mxu0
      %v709 = vadd.f32 0.0, %v708
      %v710 = vpop.f32.mrf.mxu0
      %711 = vdwg.mxu0
      %v712 = vadd.f32 %v647, %v683
      %v713 = vadd.f32 %v648, %v696
      %v714 = vadd.f32 %v649, %v709
      %s715 = scalar_lea.vmem %s1, 32
      %v716 = vld [vmem:[%s715] sm:$0xf]
      %717 = vrot.lane.b32.xlu0 %v209, 90
      %v718 = vpop.permute.xlu0 %717
      %719 = vrot.lane.b32.xlu0 %v210, 90
      %v720 = vpop.permute.xlu0 %719
      %721 = vrot.lane.b32.xlu0 %v211, 90
      %v722 = vpop.permute.xlu0 %721
      %vm723 = vcmask 736256
      %v724 = vsel %vm723, %v718, %v720
      %v725 = vsel %vm723, %v720, %v722
      %v727 = vsel %vm221, %v716, 0
      %v730 = vsel %vm225, %v724, 0
      %v733 = vsel %vm225, %v725, 0
      %v736 = vsel %vm225, %v722, 0
      %738 = vmatpush.bf16.msra.mxu0 0
      %739 = vmatpush.bf16.msra.mxu0 0
      %740 = vmatpush.bf16.msra.mxu0 0
      %741 = vmatpush.bf16.msra.mxu0 0
      %742 = vmatpush.bf16.msra.mxu0 0
      %743 = vmatpush.bf16.msra.mxu0 0
      %744 = vmatpush.bf16.msra.mxu0 0
      %745 = vmatpush.bf16.msra.mxu0 %v730
      %746 = vmatmul.bf16.gmra.mxu0 %v727
      %v747 = vpop.f32.mrf.mxu0
      %v748 = vadd.f32 0.0, %v747
      %v749 = vpop.f32.mrf.mxu0
      %750 = vdwg.mxu0
      %751 = vmatpush.bf16.msra.mxu0 0
      %752 = vmatpush.bf16.msra.mxu0 0
      %753 = vmatpush.bf16.msra.mxu0 0
      %754 = vmatpush.bf16.msra.mxu0 0
      %755 = vmatpush.bf16.msra.mxu0 0
      %756 = vmatpush.bf16.msra.mxu0 0
      %757 = vmatpush.bf16.msra.mxu0 0
      %758 = vmatpush.bf16.msra.mxu0 %v733
      %759 = vmatmul.bf16.gmra.mxu0 %v727
      %v760 = vpop.f32.mrf.mxu0
      %v761 = vadd.f32 0.0, %v760
      %v762 = vpop.f32.mrf.mxu0
      %763 = vdwg.mxu0
      %764 = vmatpush.bf16.msra.mxu0 0
      %765 = vmatpush.bf16.msra.mxu0 0
      %766 = vmatpush.bf16.msra.mxu0 0
      %767 = vmatpush.bf16.msra.mxu0 0
      %768 = vmatpush.bf16.msra.mxu0 0
      %769 = vmatpush.bf16.msra.mxu0 0
      %770 = vmatpush.bf16.msra.mxu0 0
      %771 = vmatpush.bf16.msra.mxu0 %v736
      %772 = vmatmul.bf16.gmra.mxu0 %v727
      %v773 = vpop.f32.mrf.mxu0
      %v774 = vadd.f32 0.0, %v773
      %v775 = vpop.f32.mrf.mxu0
      %776 = vdwg.mxu0
      %v777 = vadd.f32 %v712, %v748
      %v778 = vadd.f32 %v713, %v761
      %v779 = vadd.f32 %v714, %v774
      %v780 = vld [vmem:[%s2] sm:$0xff]
      %782 = vset.pattern.permute.xlu0 0
      %783 = vperm.xlu0 %782, %v780
      %v784 = vpop.permute.xlu0 %783
      %v786 = vmul.f32 %v777, %v784
      %v787 = vmul.f32 %v778, %v784
      %v788 = vmul.f32 %v779, %v784
      %v789 = vld [vmem:[%s3] sm:$0xff]
      %791 = vset.pattern.permute.xlu0 0
      %792 = vperm.xlu0 %791, %v789
      %v793 = vpop.permute.xlu0 %792
      %v795 = vadd.f32 %v786, %v793
      %v796 = vadd.f32 %v787, %v793
      %v797 = vadd.f32 %v788, %v793
      %vm798 = vcmp.gt.f32.partialorder %v795, 0.0
      %vm799 = vcmp.gt.f32.partialorder %v796, 0.0
      %vm800 = vcmp.gt.f32.partialorder %v797, 0.0
      %v801 = vmul.f32 %v795, 0.01
      %v802 = vmul.f32 %v796, 0.01
      %v803 = vmul.f32 %v797, 0.01
      %v804 = vsel %vm798, %v795, %v801
      %v805 = vsel %vm799, %v796, %v802
      %v806 = vsel %vm800, %v797, %v803
      %807 = vst [vmem:[%s197] sm:$0xff] %v804
      %808 = vst [vmem:[%s197 + $0x8] sm:$0xff] %v805
      %vm809 = vcmask 261120
      %810 = vst.msk [vmem:[%s197 + $0x10] sm:$0xff] %vm809, %v806
      %p811 = scmp.lt.s32.totalorder %s15, 1
      %s812 = scalar_select %p811, %s15, 1
      %s813 = smul.addr %s812, 3
      %s814 = smul.addr %s813, 8
      %s815 = scalar_lea.vmem %s4, %s814
      // Predicated region
      $region37: #{conv_single_forward.3} parent=35 // pred_check
        %p816 = pneg %p122
      $region38: #{conv_single_forward.3} parent=35 // pred_check_branch
        %818 = sbr.rel (%p816) target = $region40
      $region39: #{conv_single_forward.3} parent=35 // pred_region
        _
      $region40: #{conv_single_forward.3} parent=35 // pred_fallthru
        _
    $region36: #{conv_single_forward.3} parent=5 // pred_fallthru
      _
    %p819 = scmp.le.s32.totalorder 2, %s10
    // Predicated region
    $region41: #{conv_single_forward.3} parent=5 // pred_check
      %p820 = pneg %p819
    $region42: #{conv_single_forward.3} parent=5 // pred_check_branch
      %822 = sbr.rel (%p820) target = $region44
    $region43: #{conv_single_forward.3} parent=5 // pred_region
      %s823 = ssub.s32 %s10, 2
      // Predicated region
      $region45: #{conv_single_forward.3} parent=43 // pred_check
        %p824 = pneg %p128
      $region46: #{conv_single_forward.3} parent=43 // pred_check_branch
        %826 = sbr.rel (%p824) target = $region48
      $region47: #{conv_single_forward.3} parent=43 // pred_region
        %p827 = scmp.lt.s32.totalorder %s16, 1
        %s828 = scalar_select %p827, %s16, 1
        %s829 = smul.addr %s828, 3
        %s830 = smul.addr %s829, 8
        %s831 = scalar_lea.vmem %s4, %s830
      $region48: #{conv_single_forward.3} parent=43 // pred_fallthru
        _
    $region44: #{conv_single_forward.3} parent=5 // pred_fallthru
      _
  $region6: #{conv_single_forward.3} parent=0 // loop_footer
    %s14 = sadd.s32 1, %s10
  $region7: #{conv_single_forward.3} parent=0 // loop_footer_branch
    %9 = sbr.rel target = $region3
  $region8: #{conv_single_forward.3} parent=0 // loop_exit
    _

// kernel: conv_single_forward.2
$region0: #{conv_single_forward.2}
  #allocation0 [shape = 'u32[]', space=smem, size = 0x4, offset = 0x4, fixed_abs, tag = 'smem constant byte address 0x4 - core index']
  #allocation1 [shape = 'u32[72,128]{1,0:T(1,128)}', space=vmem, size = 0x9000, scoped, tag = 'internal scratch']
  %s0 = inlined_call_operand.vmem [shape: bf16[2,8,384], index: 0, kind: input, shape index: {}]
  %s1 = inlined_call_operand.vmem [shape: bf16[9,8,8], index: 1, kind: input, shape index: {}]
  %s2 = inlined_call_operand.vmem [shape: f32[2,8,2], index: 2, kind: output, shape index: {}]
  %s3 = sld [smem:[#allocation0]]
  $region45: #{conv_single_forward.2} parent=0
    _
  %s5 = ssub.s32 1, %s3
  %s6 = scalar_select 0, %s5, %s3
  loop: start=0, step=1, limit=4
  $region2: #{conv_single_forward.2} parent=0 // loop_pre_header
    _
  $region3: #{conv_single_forward.2} parent=0 // loop_header
    %s8 = sphi 0, %s12
    %p9 = scmp.ge.s32.totalorder %s8, 4
    %s15 = sphi 0, %s27
    %s16 = sphi 0, %s23
    %s17 = sphi 0, %s15
    %s18 = sphi 0, %s16
    %s19 = sphi 0, %s17
    %s20 = sphi 0, %s18
    %s32 = sphi 0, %s34
    %s35 = sphi 0, %s32
    %s36 = sphi 0, %s35
    %s52 = sphi 0, %s36
    %s56 = sphi 0, %s56
    %s58 = sphi 0, %s56
    %s59 = sphi 0, %s58
    %s73 = sphi 0, %s59
    %s79 = sphi 0, %s81
    %s82 = sphi 0, %s79
    %s83 = sphi 0, %s82
    %s99 = sphi 0, %s83
  $region4: #{conv_single_forward.2} parent=0 // loop_header_branch
    %11 = sbr.rel (%p9) target = $region8
  $region5: #{conv_single_forward.2} parent=0 // loop_body
    %s13 = ssub.s32 %s8, 1
    %s14 = ssub.s32 %s8, 2
    %s21 = sadd.s32 1, %s16
    %p22 = scmp.ge.s32.totalorder %s21, 1
    %s23 = scalar_select %p22, 0, %s21
    %s24 = sadd.s32 1, %s15
    %s25 = scalar_select %p22, %s24, %s15
    %p26 = scmp.ge.s32.totalorder %s25, 2
    %s27 = scalar_select %p26, 0, %s25
    %s28 = sadd.s32 %s15, %s16
    %s29 = sadd.s32 %s27, %s23
    %s30 = ssub.s32 %s28, %s29
    %p31 = scmp.eq.s32.totalorder %s30, 0
    %s33 = sadd.s32 %s32, 1
    %s34 = scalar_select %p31, %s32, %s33
    %p37 = pneg %p31
    %p38 = scmp.eq.s32.totalorder %s8, 1
    %p39 = por %p37, %p38
    %p40 = scmp.ne.s32.totalorder %s32, %s35
    %p41 = scmp.eq.s32.totalorder %s8, 0
    %p42 = por %p40, %p41
    %p43 = scmp.ne.s32.totalorder %s32, %s35
    %p44 = scmp.eq.s32.totalorder %s13, 1
    %p45 = por %p43, %p44
    %p46 = scmp.ne.s32.totalorder %s35, %s36
    %p47 = scmp.eq.s32.totalorder %s13, 0
    %p48 = por %p46, %p47
    %p49 = scmp.ne.s32.totalorder %s35, %s36
    %p50 = scmp.eq.s32.totalorder %s14, 1
    %p51 = por %p49, %p50
    %p53 = scmp.ne.s32.totalorder %s36, %s52
    %p54 = scmp.eq.s32.totalorder %s14, 0
    %p55 = por %p53, %p54
    %s57 = sadd.s32 %s56, 1
    %p60 = scmp.eq.s32.totalorder %s8, 1
    %p61 = scmp.ne.s32.totalorder %s56, %s58
    %p62 = scmp.eq.s32.totalorder %s8, 0
    %p63 = por %p61, %p62
    %p64 = scmp.ne.s32.totalorder %s56, %s58
    %p65 = scmp.eq.s32.totalorder %s13, 1
    %p66 = por %p64, %p65
    %p67 = scmp.ne.s32.totalorder %s58, %s59
    %p68 = scmp.eq.s32.totalorder %s13, 0
    %p69 = por %p67, %p68
    %p70 = scmp.ne.s32.totalorder %s58, %s59
    %p71 = scmp.eq.s32.totalorder %s14, 1
    %p72 = por %p70, %p71
    %p74 = scmp.ne.s32.totalorder %s59, %s73
    %p75 = scmp.eq.s32.totalorder %s14, 0
    %p76 = por %p74, %p75
    %s77 = ssub.s32 %s15, %s27
    %p78 = scmp.eq.s32.totalorder %s77, 0
    %s80 = sadd.s32 %s79, 1
    %s81 = scalar_select %p78, %s79, %s80
    %p84 = pneg %p78
    %p85 = scmp.eq.s32.totalorder %s8, 1
    %p86 = por %p84, %p85
    %p87 = scmp.ne.s32.totalorder %s79, %s82
    %p88 = scmp.eq.s32.totalorder %s8, 0
    %p89 = por %p87, %p88
    %p90 = scmp.ne.s32.totalorder %s79, %s82
    %p91 = scmp.eq.s32.totalorder %s13, 1
    %p92 = por %p90, %p91
    %p93 = scmp.ne.s32.totalorder %s82, %s83
    %p94 = scmp.eq.s32.totalorder %s13, 0
    %p95 = por %p93, %p94
    %p96 = scmp.ne.s32.totalorder %s82, %s83
    %p97 = scmp.eq.s32.totalorder %s14, 1
    %p98 = por %p96, %p97
    %p100 = scmp.ne.s32.totalorder %s83, %s99
    %p101 = scmp.eq.s32.totalorder %s14, 0
    %p102 = por %p100, %p101
    %p103 = scmp.le.s32.totalorder 1, %s8
    %p104 = scmp.lt.s32.totalorder %s8, 3
    %p105 = pnand %p103, %p104
    %p106 = pneg %p105
    // Predicated region
    $region9: #{conv_single_forward.2} parent=5 // pred_check
      _
    $region10: #{conv_single_forward.2} parent=5 // pred_check_branch
      %108 = sbr.rel (%p105) target = $region12
    $region11: #{conv_single_forward.2} parent=5 // pred_region
      %s109 = ssub.s32 %s8, 1
      // Predicated region
      $region13: #{conv_single_forward.2} parent=11 // pred_check
        %p110 = pneg %p69
      $region14: #{conv_single_forward.2} parent=11 // pred_check_branch
        %112 = sbr.rel (%p110) target = $region16
      $region15: #{conv_single_forward.2} parent=11 // pred_region
        _
      $region16: #{conv_single_forward.2} parent=11 // pred_fallthru
        _
    $region12: #{conv_single_forward.2} parent=5 // pred_fallthru
      _
    %p113 = scmp.lt.s32.totalorder %s8, 2
    // Predicated region
    $region17: #{conv_single_forward.2} parent=5 // pred_check
      %p114 = pneg %p113
    $region18: #{conv_single_forward.2} parent=5 // pred_check_branch
      %116 = sbr.rel (%p114) target = $region20
    $region19: #{conv_single_forward.2} parent=5 // pred_region
      // Predicated region
      $region21: #{conv_single_forward.2} parent=19 // pred_check
        %p117 = pneg %p42
      $region22: #{conv_single_forward.2} parent=19 // pred_check_branch
        %119 = sbr.rel (%p117) target = $region24
      $region23: #{conv_single_forward.2} parent=19 // pred_region
        %s120 = sadd.s32 %s15, %s16
        %p121 = scmp.lt.s32.totalorder %s120, 1
        %s122 = scalar_select %p121, %s120, 1
        %s123 = smul.addr %s122, 3
        %s124 = smul.addr %s123, 4
        %s125 = scalar_lea.vmem %s0, %s124
        %s126 = sadd.s32 %s15, %s16
      $region24: #{conv_single_forward.2} parent=19 // pred_fallthru
        _
    $region20: #{conv_single_forward.2} parent=5 // pred_fallthru
      _
    %p127 = scmp.le.s32.totalorder 1, %s8
    %p128 = scmp.lt.s32.totalorder %s8, 3
    %p129 = pnand %p127, %p128
    %p130 = pneg %p129
    // Predicated region
    $region25: #{conv_single_forward.2} parent=5 // pred_check
      _
    $region26: #{conv_single_forward.2} parent=5 // pred_check_branch
      %132 = sbr.rel (%p129) target = $region28
    $region27: #{conv_single_forward.2} parent=5 // pred_region
      %s133 = ssub.s32 %s8, 1
      %s134 = sadd.s32 %s17, %s18
      %p135 = scmp.lt.s32.totalorder %s134, 1
      %s136 = scalar_select %p135, %s134, 1
      %s137 = smul.addr %s136, 3
      %s138 = smul.addr %s137, 4
      %s139 = scalar_lea.vmem %s0, %s138
      %p140 = pneg %p48
      %p141 = pneg %p45
      %p142 = pneg %p69
      %p143 = pneg %p66
      %p144 = pneg %p95
      %p145 = pneg %p92
      %p146 = scmp.lt.s32.totalorder %s17, 1
      %s147 = scalar_select %p146, %s17, 1
      %s148 = smul.addr %s147, 8
      %s149 = scalar_lea.vmem %s2, %s148
      %s150 = sadd.s32 %s17, %s18
      %p151 = scmp.lt.s32.totalorder %s150, 1
      %s152 = scalar_select %p151, %s150, 1
      %s153 = smul.addr %s152, 3
      %s154 = smul.addr %s153, 4
      %s155 = scalar_lea.vmem %s0, %s154
      %s156 = sadd.s32 %s17, %s18
      %p157 = scmp.lt.s32.totalorder %s17, 1
      %s158 = scalar_select %p157, %s17, 1
      %s159 = smul.addr %s158, 8
      %s160 = scalar_lea.vmem %s2, %s159
      %p162 = scmp.eq.s32.totalorder %s18, 0
      // Predicated region
      $region29: #{conv_single_forward.2} parent=27 // pred_check
        %p163 = pneg %p162
      $region30: #{conv_single_forward.2} parent=27 // pred_check_branch
        %165 = sbr.rel (%p163) target = $region32
      $region31: #{conv_single_forward.2} parent=27 // pred_region
        %vm166 = vcmask 15360
        %167 = vst.msk [vmem:[%s160] sm:$0xff] %vm166, 0.0
      $region32: #{conv_single_forward.2} parent=27 // pred_fallthru
        _
      %v168 = vld [vmem:[%s155] sm:$0xff]
      %v169 = vld [vmem:[%s155 + $0x8] sm:$0xf]
      %v170 = vld [vmem:[%s1] sm:$0xf]
      %s171 = scalar_lea.vmem %s1, 4
      %v172 = vld [vmem:[%s171] sm:$0xf]
      %v175 = vunpack.c.l.b16 %v168
      %v176 = vunpack.c.h.b16 %v168
      %v177 = vunpack.c.l.b16 %v169
      %v178 = vpack.c.b16 %v175, %v175
      %v179 = vpack.c.b16 %v176, %v176
      %v180 = vpack.c.b16 %v177, %v177
      %181 = vrot.lane.b32.xlu0 %v178, 127
      %v182 = vpop.permute.xlu0 %181
      %183 = vrot.lane.b32.xlu0 %v179, 127
      %v184 = vpop.permute.xlu0 %183
      %185 = vrot.lane.b32.xlu0 %v180, 127
      %v186 = vpop.permute.xlu0 %185
      %vm187 = vcmask 1039360
      %v188 = vsel %vm187, %v182, %v184
      %v189 = vsel %vm187, %v184, %v186
      %vm190 = vcmask 64512
      %v192 = vsel %vm190, %v172, 0
      %vm194 = vcmask 1043456
      %v196 = vsel %vm194, %v188, 0
      %v199 = vsel %vm194, %v189, 0
      %v202 = vsel %vm194, %v186, 0
      %204 = vmatpush.bf16.msra.mxu0 0
      %205 = vmatpush.bf16.msra.mxu0 0
      %206 = vmatpush.bf16.msra.mxu0 0
      %207 = vmatpush.bf16.msra.mxu0 0
      %208 = vmatpush.bf16.msra.mxu0 0
      %209 = vmatpush.bf16.msra.mxu0 0
      %210 = vmatpush.bf16.msra.mxu0 0
      %211 = vmatpush.bf16.msra.mxu0 %v196
      %212 = vmatmul.bf16.gmra.mxu0 %v192
      %v213 = vpop.f32.mrf.mxu0
      %v214 = vadd.f32 0.0, %v213
      %v215 = vpop.f32.mrf.mxu0
      %216 = vdwg.mxu0
      %217 = vmatpush.bf16.msra.mxu0 0
      %218 = vmatpush.bf16.msra.mxu0 0
      %219 = vmatpush.bf16.msra.mxu0 0
      %220 = vmatpush.bf16.msra.mxu0 0
      %221 = vmatpush.bf16.msra.mxu0 0
      %222 = vmatpush.bf16.msra.mxu0 0
      %223 = vmatpush.bf16.msra.mxu0 0
      %224 = vmatpush.bf16.msra.mxu0 %v199
      %225 = vmatmul.bf16.gmra.mxu0 %v192
      %v226 = vpop.f32.mrf.mxu0
      %v227 = vadd.f32 0.0, %v226
      %v228 = vpop.f32.mrf.mxu0
      %229 = vdwg.mxu0
      %230 = vmatpush.bf16.msra.mxu0 0
      %231 = vmatpush.bf16.msra.mxu0 0
      %232 = vmatpush.bf16.msra.mxu0 0
      %233 = vmatpush.bf16.msra.mxu0 0
      %234 = vmatpush.bf16.msra.mxu0 0
      %235 = vmatpush.bf16.msra.mxu0 0
      %236 = vmatpush.bf16.msra.mxu0 0
      %237 = vmatpush.bf16.msra.mxu0 %v202
      %238 = vmatmul.bf16.gmra.mxu0 %v192
      %v239 = vpop.f32.mrf.mxu0
      %v240 = vadd.f32 0.0, %v239
      %v241 = vpop.f32.mrf.mxu0
      %242 = vdwg.mxu0
      %v244 = vsel %vm190, %v170, 0
      %v247 = vsel %vm194, %v178, 0
      %v250 = vsel %vm194, %v179, 0
      %v253 = vsel %vm194, %v180, 0
      %255 = vmatpush.bf16.msra.mxu0 0
      %256 = vmatpush.bf16.msra.mxu0 0
      %257 = vmatpush.bf16.msra.mxu0 0
      %258 = vmatpush.bf16.msra.mxu0 0
      %259 = vmatpush.bf16.msra.mxu0 0
      %260 = vmatpush.bf16.msra.mxu0 0
      %261 = vmatpush.bf16.msra.mxu0 0
      %262 = vmatpush.bf16.msra.mxu0 %v247
      %263 = vmatmul.bf16.gmra.mxu0 %v244
      %v264 = vpop.f32.mrf.mxu0
      %v265 = vadd.f32 %v214, %v264
      %v266 = vpop.f32.mrf.mxu0
      %267 = vdwg.mxu0
      %268 = vmatpush.bf16.msra.mxu0 0
      %269 = vmatpush.bf16.msra.mxu0 0
      %270 = vmatpush.bf16.msra.mxu0 0
      %271 = vmatpush.bf16.msra.mxu0 0
      %272 = vmatpush.bf16.msra.mxu0 0
      %273 = vmatpush.bf16.msra.mxu0 0
      %274 = vmatpush.bf16.msra.mxu0 0
      %275 = vmatpush.bf16.msra.mxu0 %v250
      %276 = vmatmul.bf16.gmra.mxu0 %v244
      %v277 = vpop.f32.mrf.mxu0
      %v278 = vadd.f32 %v227, %v277
      %v279 = vpop.f32.mrf.mxu0
      %280 = vdwg.mxu0
      %281 = vmatpush.bf16.msra.mxu0 0
      %282 = vmatpush.bf16.msra.mxu0 0
      %283 = vmatpush.bf16.msra.mxu0 0
      %284 = vmatpush.bf16.msra.mxu0 0
      %285 = vmatpush.bf16.msra.mxu0 0
      %286 = vmatpush.bf16.msra.mxu0 0
      %287 = vmatpush.bf16.msra.mxu0 0
      %288 = vmatpush.bf16.msra.mxu0 %v253
      %289 = vmatmul.bf16.gmra.mxu0 %v244
      %v290 = vpop.f32.mrf.mxu0
      %v291 = vadd.f32 %v240, %v290
      %v292 = vpop.f32.mrf.mxu0
      %293 = vdwg.mxu0
      %s294 = scalar_lea.vmem %s1, 8
      %v295 = vld [vmem:[%s294] sm:$0xf]
      %296 = vrot.lane.b32.xlu0 %v178, 126
      %v297 = vpop.permute.xlu0 %296
      %298 = vrot.lane.b32.xlu0 %v179, 126
      %v299 = vpop.permute.xlu0 %298
      %300 = vrot.lane.b32.xlu0 %v180, 126
      %v301 = vpop.permute.xlu0 %300
      %vm302 = vcmask 1031168
      %v303 = vsel %vm302, %v297, %v299
      %v304 = vsel %vm302, %v299, %v301
      %v306 = vsel %vm190, %v295, 0
      %v309 = vsel %vm194, %v303, 0
      %v312 = vsel %vm194, %v304, 0
      %v315 = vsel %vm194, %v301, 0
      %317 = vmatpush.bf16.msra.mxu0 0
      %318 = vmatpush.bf16.msra.mxu0 0
      %319 = vmatpush.bf16.msra.mxu0 0
      %320 = vmatpush.bf16.msra.mxu0 0
      %321 = vmatpush.bf16.msra.mxu0 0
      %322 = vmatpush.bf16.msra.mxu0 0
      %323 = vmatpush.bf16.msra.mxu0 0
      %324 = vmatpush.bf16.msra.mxu0 %v309
      %325 = vmatmul.bf16.gmra.mxu0 %v306
      %v326 = vpop.f32.mrf.mxu0
      %v327 = vadd.f32 0.0, %v326
      %v328 = vpop.f32.mrf.mxu0
      %329 = vdwg.mxu0
      %330 = vmatpush.bf16.msra.mxu0 0
      %331 = vmatpush.bf16.msra.mxu0 0
      %332 = vmatpush.bf16.msra.mxu0 0
      %333 = vmatpush.bf16.msra.mxu0 0
      %334 = vmatpush.bf16.msra.mxu0 0
      %335 = vmatpush.bf16.msra.mxu0 0
      %336 = vmatpush.bf16.msra.mxu0 0
      %337 = vmatpush.bf16.msra.mxu0 %v312
      %338 = vmatmul.bf16.gmra.mxu0 %v306
      %v339 = vpop.f32.mrf.mxu0
      %v340 = vadd.f32 0.0, %v339
      %v341 = vpop.f32.mrf.mxu0
      %342 = vdwg.mxu0
      %343 = vmatpush.bf16.msra.mxu0 0
      %344 = vmatpush.bf16.msra.mxu0 0
      %345 = vmatpush.bf16.msra.mxu0 0
      %346 = vmatpush.bf16.msra.mxu0 0
      %347 = vmatpush.bf16.msra.mxu0 0
      %348 = vmatpush.bf16.msra.mxu0 0
      %349 = vmatpush.bf16.msra.mxu0 0
      %350 = vmatpush.bf16.msra.mxu0 %v315
      %351 = vmatmul.bf16.gmra.mxu0 %v306
      %v352 = vpop.f32.mrf.mxu0
      %v353 = vadd.f32 0.0, %v352
      %v354 = vpop.f32.mrf.mxu0
      %355 = vdwg.mxu0
      %v356 = vadd.f32 %v265, %v327
      %v357 = vadd.f32 %v278, %v340
      %v358 = vadd.f32 %v291, %v353
      %s359 = scalar_lea.vmem %s1, 12
      %v360 = vld [vmem:[%s359] sm:$0xf]
      %361 = vrot.lane.b32.xlu0 %v178, 110
      %v362 = vpop.permute.xlu0 %361
      %363 = vrot.lane.b32.xlu0 %v179, 110
      %v364 = vpop.permute.xlu0 %363
      %365 = vrot.lane.b32.xlu0 %v180, 110
      %v366 = vpop.permute.xlu0 %365
      %vm367 = vcmask 900096
      %v368 = vsel %vm367, %v362, %v364
      %v369 = vsel %vm367, %v364, %v366
      %v371 = vsel %vm190, %v360, 0
      %v374 = vsel %vm194, %v368, 0
      %v377 = vsel %vm194, %v369, 0
      %v380 = vsel %vm194, %v366, 0
      %382 = vmatpush.bf16.msra.mxu0 0
      %383 = vmatpush.bf16.msra.mxu0 0
      %384 = vmatpush.bf16.msra.mxu0 0
      %385 = vmatpush.bf16.msra.mxu0 0
      %386 = vmatpush.bf16.msra.mxu0 0
      %387 = vmatpush.bf16.msra.mxu0 0
      %388 = vmatpush.bf16.msra.mxu0 0
      %389 = vmatpush.bf16.msra.mxu0 %v374
      %390 = vmatmul.bf16.gmra.mxu0 %v371
      %v391 = vpop.f32.mrf.mxu0
      %v392 = vadd.f32 0.0, %v391
      %v393 = vpop.f32.mrf.mxu0
      %394 = vdwg.mxu0
      %395 = vmatpush.bf16.msra.mxu0 0
      %396 = vmatpush.bf16.msra.mxu0 0
      %397 = vmatpush.bf16.msra.mxu0 0
      %398 = vmatpush.bf16.msra.mxu0 0
      %399 = vmatpush.bf16.msra.mxu0 0
      %400 = vmatpush.bf16.msra.mxu0 0
      %401 = vmatpush.bf16.msra.mxu0 0
      %402 = vmatpush.bf16.msra.mxu0 %v377
      %403 = vmatmul.bf16.gmra.mxu0 %v371
      %v404 = vpop.f32.mrf.mxu0
      %v405 = vadd.f32 0.0, %v404
      %v406 = vpop.f32.mrf.mxu0
      %407 = vdwg.mxu0
      %408 = vmatpush.bf16.msra.mxu0 0
      %409 = vmatpush.bf16.msra.mxu0 0
      %410 = vmatpush.bf16.msra.mxu0 0
      %411 = vmatpush.bf16.msra.mxu0 0
      %412 = vmatpush.bf16.msra.mxu0 0
      %413 = vmatpush.bf16.msra.mxu0 0
      %414 = vmatpush.bf16.msra.mxu0 0
      %415 = vmatpush.bf16.msra.mxu0 %v380
      %416 = vmatmul.bf16.gmra.mxu0 %v371
      %v417 = vpop.f32.mrf.mxu0
      %v418 = vadd.f32 0.0, %v417
      %v419 = vpop.f32.mrf.mxu0
      %420 = vdwg.mxu0
      %v421 = vadd.f32 %v356, %v392
      %v422 = vadd.f32 %v357, %v405
      %v423 = vadd.f32 %v358, %v418
      %s424 = scalar_lea.vmem %s1, 16
      %v425 = vld [vmem:[%s424] sm:$0xf]
      %426 = vrot.lane.b32.xlu0 %v178, 109
      %v427 = vpop.permute.xlu0 %426
      %428 = vrot.lane.b32.xlu0 %v179, 109
      %v429 = vpop.permute.xlu0 %428
      %430 = vrot.lane.b32.xlu0 %v180, 109
      %v431 = vpop.permute.xlu0 %430
      %vm432 = vcmask 891904
      %v433 = vsel %vm432, %v427, %v429
      %v434 = vsel %vm432, %v429, %v431
      %v436 = vsel %vm190, %v425, 0
      %v439 = vsel %vm194, %v433, 0
      %v442 = vsel %vm194, %v434, 0
      %v445 = vsel %vm194, %v431, 0
      %447 = vmatpush.bf16.msra.mxu0 0
      %448 = vmatpush.bf16.msra.mxu0 0
      %449 = vmatpush.bf16.msra.mxu0 0
      %450 = vmatpush.bf16.msra.mxu0 0
      %451 = vmatpush.bf16.msra.mxu0 0
      %452 = vmatpush.bf16.msra.mxu0 0
      %453 = vmatpush.bf16.msra.mxu0 0
      %454 = vmatpush.bf16.msra.mxu0 %v439
      %455 = vmatmul.bf16.gmra.mxu0 %v436
      %v456 = vpop.f32.mrf.mxu0
      %v457 = vadd.f32 0.0, %v456
      %v458 = vpop.f32.mrf.mxu0
      %459 = vdwg.mxu0
      %460 = vmatpush.bf16.msra.mxu0 0
      %461 = vmatpush.bf16.msra.mxu0 0
      %462 = vmatpush.bf16.msra.mxu0 0
      %463 = vmatpush.bf16.msra.mxu0 0
      %464 = vmatpush.bf16.msra.mxu0 0
      %465 = vmatpush.bf16.msra.mxu0 0
      %466 = vmatpush.bf16.msra.mxu0 0
      %467 = vmatpush.bf16.msra.mxu0 %v442
      %468 = vmatmul.bf16.gmra.mxu0 %v436
      %v469 = vpop.f32.mrf.mxu0
      %v470 = vadd.f32 0.0, %v469
      %v471 = vpop.f32.mrf.mxu0
      %472 = vdwg.mxu0
      %473 = vmatpush.bf16.msra.mxu0 0
      %474 = vmatpush.bf16.msra.mxu0 0
      %475 = vmatpush.bf16.msra.mxu0 0
      %476 = vmatpush.bf16.msra.mxu0 0
      %477 = vmatpush.bf16.msra.mxu0 0
      %478 = vmatpush.bf16.msra.mxu0 0
      %479 = vmatpush.bf16.msra.mxu0 0
      %480 = vmatpush.bf16.msra.mxu0 %v445
      %481 = vmatmul.bf16.gmra.mxu0 %v436
      %v482 = vpop.f32.mrf.mxu0
      %v483 = vadd.f32 0.0, %v482
      %v484 = vpop.f32.mrf.mxu0
      %485 = vdwg.mxu0
      %v486 = vadd.f32 %v421, %v457
      %v487 = vadd.f32 %v422, %v470
      %v488 = vadd.f32 %v423, %v483
      %s489 = scalar_lea.vmem %s1, 20
      %v490 = vld [vmem:[%s489] sm:$0xf]
      %491 = vrot.lane.b32.xlu0 %v178, 108
      %v492 = vpop.permute.xlu0 %491
      %493 = vrot.lane.b32.xlu0 %v179, 108
      %v494 = vpop.permute.xlu0 %493
      %495 = vrot.lane.b32.xlu0 %v180, 108
      %v496 = vpop.permute.xlu0 %495
      %vm497 = vcmask 883712
      %v498 = vsel %vm497, %v492, %v494
      %v499 = vsel %vm497, %v494, %v496
      %v501 = vsel %vm190, %v490, 0
      %v504 = vsel %vm194, %v498, 0
      %v507 = vsel %vm194, %v499, 0
      %v510 = vsel %vm194, %v496, 0
      %512 = vmatpush.bf16.msra.mxu0 0
      %513 = vmatpush.bf16.msra.mxu0 0
      %514 = vmatpush.bf16.msra.mxu0 0
      %515 = vmatpush.bf16.msra.mxu0 0
      %516 = vmatpush.bf16.msra.mxu0 0
      %517 = vmatpush.bf16.msra.mxu0 0
      %518 = vmatpush.bf16.msra.mxu0 0
      %519 = vmatpush.bf16.msra.mxu0 %v504
      %520 = vmatmul.bf16.gmra.mxu0 %v501
      %v521 = vpop.f32.mrf.mxu0
      %v522 = vadd.f32 0.0, %v521
      %v523 = vpop.f32.mrf.mxu0
      %524 = vdwg.mxu0
      %525 = vmatpush.bf16.msra.mxu0 0
      %526 = vmatpush.bf16.msra.mxu0 0
      %527 = vmatpush.bf16.msra.mxu0 0
      %528 = vmatpush.bf16.msra.mxu0 0
      %529 = vmatpush.bf16.msra.mxu0 0
      %530 = vmatpush.bf16.msra.mxu0 0
      %531 = vmatpush.bf16.msra.mxu0 0
      %532 = vmatpush.bf16.msra.mxu0 %v507
      %533 = vmatmul.bf16.gmra.mxu0 %v501
      %v534 = vpop.f32.mrf.mxu0
      %v535 = vadd.f32 0.0, %v534
      %v536 = vpop.f32.mrf.mxu0
      %537 = vdwg.mxu0
      %538 = vmatpush.bf16.msra.mxu0 0
      %539 = vmatpush.bf16.msra.mxu0 0
      %540 = vmatpush.bf16.msra.mxu0 0
      %541 = vmatpush.bf16.msra.mxu0 0
      %542 = vmatpush.bf16.msra.mxu0 0
      %543 = vmatpush.bf16.msra.mxu0 0
      %544 = vmatpush.bf16.msra.mxu0 0
      %545 = vmatpush.bf16.msra.mxu0 %v510
      %546 = vmatmul.bf16.gmra.mxu0 %v501
      %v547 = vpop.f32.mrf.mxu0
      %v548 = vadd.f32 0.0, %v547
      %v549 = vpop.f32.mrf.mxu0
      %550 = vdwg.mxu0
      %v551 = vadd.f32 %v486, %v522
      %v552 = vadd.f32 %v487, %v535
      %v553 = vadd.f32 %v488, %v548
      %s554 = scalar_lea.vmem %s1, 24
      %v555 = vld [vmem:[%s554] sm:$0xf]
      %556 = vrot.lane.b32.xlu0 %v178, 92
      %v557 = vpop.permute.xlu0 %556
      %558 = vrot.lane.b32.xlu0 %v179, 92
      %v559 = vpop.permute.xlu0 %558
      %560 = vrot.lane.b32.xlu0 %v180, 92
      %v561 = vpop.permute.xlu0 %560
      %vm562 = vcmask 752640
      %v563 = vsel %vm562, %v557, %v559
      %v564 = vsel %vm562, %v559, %v561
      %v566 = vsel %vm190, %v555, 0
      %v569 = vsel %vm194, %v563, 0
      %v572 = vsel %vm194, %v564, 0
      %v575 = vsel %vm194, %v561, 0
      %577 = vmatpush.bf16.msra.mxu0 0
      %578 = vmatpush.bf16.msra.mxu0 0
      %579 = vmatpush.bf16.msra.mxu0 0
      %580 = vmatpush.bf16.msra.mxu0 0
      %581 = vmatpush.bf16.msra.mxu0 0
      %582 = vmatpush.bf16.msra.mxu0 0
      %583 = vmatpush.bf16.msra.mxu0 0
      %584 = vmatpush.bf16.msra.mxu0 %v569
      %585 = vmatmul.bf16.gmra.mxu0 %v566
      %v586 = vpop.f32.mrf.mxu0
      %v587 = vadd.f32 0.0, %v586
      %v588 = vpop.f32.mrf.mxu0
      %589 = vdwg.mxu0
      %590 = vmatpush.bf16.msra.mxu0 0
      %591 = vmatpush.bf16.msra.mxu0 0
      %592 = vmatpush.bf16.msra.mxu0 0
      %593 = vmatpush.bf16.msra.mxu0 0
      %594 = vmatpush.bf16.msra.mxu0 0
      %595 = vmatpush.bf16.msra.mxu0 0
      %596 = vmatpush.bf16.msra.mxu0 0
      %597 = vmatpush.bf16.msra.mxu0 %v572
      %598 = vmatmul.bf16.gmra.mxu0 %v566
      %v599 = vpop.f32.mrf.mxu0
      %v600 = vadd.f32 0.0, %v599
      %v601 = vpop.f32.mrf.mxu0
      %602 = vdwg.mxu0
      %603 = vmatpush.bf16.msra.mxu0 0
      %604 = vmatpush.bf16.msra.mxu0 0
      %605 = vmatpush.bf16.msra.mxu0 0
      %606 = vmatpush.bf16.msra.mxu0 0
      %607 = vmatpush.bf16.msra.mxu0 0
      %608 = vmatpush.bf16.msra.mxu0 0
      %609 = vmatpush.bf16.msra.mxu0 0
      %610 = vmatpush.bf16.msra.mxu0 %v575
      %611 = vmatmul.bf16.gmra.mxu0 %v566
      %v612 = vpop.f32.mrf.mxu0
      %v613 = vadd.f32 0.0, %v612
      %v614 = vpop.f32.mrf.mxu0
      %615 = vdwg.mxu0
      %v616 = vadd.f32 %v551, %v587
      %v617 = vadd.f32 %v552, %v600
      %v618 = vadd.f32 %v553, %v613
      %s619 = scalar_lea.vmem %s1, 28
      %v620 = vld [vmem:[%s619] sm:$0xf]
      %621 = vrot.lane.b32.xlu0 %v178, 91
      %v622 = vpop.permute.xlu0 %621
      %623 = vrot.lane.b32.xlu0 %v179, 91
      %v624 = vpop.permute.xlu0 %623
      %625 = vrot.lane.b32.xlu0 %v180, 91
      %v626 = vpop.permute.xlu0 %625
      %vm627 = vcmask 744448
      %v628 = vsel %vm627, %v622, %v624
      %v629 = vsel %vm627, %v624, %v626
      %v631 = vsel %vm190, %v620, 0
      %v634 = vsel %vm194, %v628, 0
      %v637 = vsel %vm194, %v629, 0
      %v640 = vsel %vm194, %v626, 0
      %642 = vmatpush.bf16.msra.mxu0 0
      %643 = vmatpush.bf16.msra.mxu0 0
      %644 = vmatpush.bf16.msra.mxu0 0
      %645 = vmatpush.bf16.msra.mxu0 0
      %646 = vmatpush.bf16.msra.mxu0 0
      %647 = vmatpush.bf16.msra.mxu0 0
      %648 = vmatpush.bf16.msra.mxu0 0
      %649 = vmatpush.bf16.msra.mxu0 %v634
      %650 = vmatmul.bf16.gmra.mxu0 %v631
      %v651 = vpop.f32.mrf.mxu0
      %v652 = vadd.f32 0.0, %v651
      %v653 = vpop.f32.mrf.mxu0
      %654 = vdwg.mxu0
      %655 = vmatpush.bf16.msra.mxu0 0
      %656 = vmatpush.bf16.msra.mxu0 0
      %657 = vmatpush.bf16.msra.mxu0 0
      %658 = vmatpush.bf16.msra.mxu0 0
      %659 = vmatpush.bf16.msra.mxu0 0
      %660 = vmatpush.bf16.msra.mxu0 0
      %661 = vmatpush.bf16.msra.mxu0 0
      %662 = vmatpush.bf16.msra.mxu0 %v637
      %663 = vmatmul.bf16.gmra.mxu0 %v631
      %v664 = vpop.f32.mrf.mxu0
      %v665 = vadd.f32 0.0, %v664
      %v666 = vpop.f32.mrf.mxu0
      %667 = vdwg.mxu0
      %668 = vmatpush.bf16.msra.mxu0 0
      %669 = vmatpush.bf16.msra.mxu0 0
      %670 = vmatpush.bf16.msra.mxu0 0
      %671 = vmatpush.bf16.msra.mxu0 0
      %672 = vmatpush.bf16.msra.mxu0 0
      %673 = vmatpush.bf16.msra.mxu0 0
      %674 = vmatpush.bf16.msra.mxu0 0
      %675 = vmatpush.bf16.msra.mxu0 %v640
      %676 = vmatmul.bf16.gmra.mxu0 %v631
      %v677 = vpop.f32.mrf.mxu0
      %v678 = vadd.f32 0.0, %v677
      %v679 = vpop.f32.mrf.mxu0
      %680 = vdwg.mxu0
      %v681 = vadd.f32 %v616, %v652
      %v682 = vadd.f32 %v617, %v665
      %v683 = vadd.f32 %v618, %v678
      %s684 = scalar_lea.vmem %s1, 32
      %v685 = vld [vmem:[%s684] sm:$0xf]
      %686 = vrot.lane.b32.xlu0 %v178, 90
      %v687 = vpop.permute.xlu0 %686
      %688 = vrot.lane.b32.xlu0 %v179, 90
      %v689 = vpop.permute.xlu0 %688
      %690 = vrot.lane.b32.xlu0 %v180, 90
      %v691 = vpop.permute.xlu0 %690
      %vm692 = vcmask 736256
      %v693 = vsel %vm692, %v687, %v689
      %v694 = vsel %vm692, %v689, %v691
      %v696 = vsel %vm190, %v685, 0
      %v699 = vsel %vm194, %v693, 0
      %v702 = vsel %vm194, %v694, 0
      %v705 = vsel %vm194, %v691, 0
      %707 = vmatpush.bf16.msra.mxu0 0
      %708 = vmatpush.bf16.msra.mxu0 0
      %709 = vmatpush.bf16.msra.mxu0 0
      %710 = vmatpush.bf16.msra.mxu0 0
      %711 = vmatpush.bf16.msra.mxu0 0
      %712 = vmatpush.bf16.msra.mxu0 0
      %713 = vmatpush.bf16.msra.mxu0 0
      %714 = vmatpush.bf16.msra.mxu0 %v699
      %715 = vmatmul.bf16.gmra.mxu0 %v696
      %v716 = vpop.f32.mrf.mxu0
      %v717 = vadd.f32 0.0, %v716
      %v718 = vpop.f32.mrf.mxu0
      %719 = vdwg.mxu0
      %720 = vmatpush.bf16.msra.mxu0 0
      %721 = vmatpush.bf16.msra.mxu0 0
      %722 = vmatpush.bf16.msra.mxu0 0
      %723 = vmatpush.bf16.msra.mxu0 0
      %724 = vmatpush.bf16.msra.mxu0 0
      %725 = vmatpush.bf16.msra.mxu0 0
      %726 = vmatpush.bf16.msra.mxu0 0
      %727 = vmatpush.bf16.msra.mxu0 %v702
      %728 = vmatmul.bf16.gmra.mxu0 %v696
      %v729 = vpop.f32.mrf.mxu0
      %v730 = vadd.f32 0.0, %v729
      %v731 = vpop.f32.mrf.mxu0
      %732 = vdwg.mxu0
      %733 = vmatpush.bf16.msra.mxu0 0
      %734 = vmatpush.bf16.msra.mxu0 0
      %735 = vmatpush.bf16.msra.mxu0 0
      %736 = vmatpush.bf16.msra.mxu0 0
      %737 = vmatpush.bf16.msra.mxu0 0
      %738 = vmatpush.bf16.msra.mxu0 0
      %739 = vmatpush.bf16.msra.mxu0 0
      %740 = vmatpush.bf16.msra.mxu0 %v705
      %741 = vmatmul.bf16.gmra.mxu0 %v696
      %v742 = vpop.f32.mrf.mxu0
      %v743 = vadd.f32 0.0, %v742
      %v744 = vpop.f32.mrf.mxu0
      %745 = vdwg.mxu0
      %v746 = vadd.f32 %v681, %v717
      %v747 = vadd.f32 %v682, %v730
      %v748 = vadd.f32 %v683, %v743
      %v749 = vlaneseq
      %v750 = vand.u32 %v749, 127
      %v751 = vadd.s32 %v750, 128
      %v752 = vadd.s32 %v750, 256
      %vm753 = vcmp.lt.s32.totalorder %v750, 0
      %v754 = vsub.s32 0, %v750
      %v755 = vsel %vm753, %v754, %v750
      %v756 = vand.u32 %v755, 65535
      %v757 = vshrl.u32 %v755, 16
      %v759 = vmul.u32 %v756, 14564
      %v760 = vmul.u32 %v756, 58254
      %v761 = vmul.u32 %v757, 14564
      %v762 = vmul.u32 %v757, 58254
      %v763 = vshll.u32 %v760, 16
      %v764 = vshrl.u32 %v760, 16
      %v765 = vshll.u32 %v761, 16
      %v766 = vshrl.u32 %v761, 16
      %vm767 = vc.u32 %v759, %v763
      %v768 = vsel %vm767, 1, 0
      %v769 = vadd.s32 %v759, %v763
      %v770 = vadd.s32 %v762, %v768
      %vm771 = vc.u32 %v769, %v765
      %v772 = vsel %vm771, 1, 0
      %v773 = vadd.s32 %v769, %v765
      %v774 = vadd.s32 %v770, %v772
      %v775 = vadd.s32 %v774, %v764
      %v776 = vadd.s32 %v775, %v766
      %v777 = vshrl.u32 %v776, 4
      %v778 = vmul.u32 %v777, 18
      %v779 = vsub.s32 %v755, %v778
      %v780 = vsub.s32 0, %v779
      %v781 = vsel %vm753, %v780, %v779
      %vm782 = vcmp.lt.s32.totalorder %v751, 0
      %v783 = vsub.s32 0, %v751
      %v784 = vsel %vm782, %v783, %v751
      %v785 = vand.u32 %v784, 65535
      %v786 = vshrl.u32 %v784, 16
      %v788 = vmul.u32 %v785, 14564
      %v789 = vmul.u32 %v785, 58254
      %v790 = vmul.u32 %v786, 14564
      %v791 = vmul.u32 %v786, 58254
      %v792 = vshll.u32 %v789, 16
      %v793 = vshrl.u32 %v789, 16
      %v794 = vshll.u32 %v790, 16
      %v795 = vshrl.u32 %v790, 16
      %vm796 = vc.u32 %v788, %v792
      %v797 = vsel %vm796, 1, 0
      %v798 = vadd.s32 %v788, %v792
      %v799 = vadd.s32 %v791, %v797
      %vm800 = vc.u32 %v798, %v794
      %v801 = vsel %vm800, 1, 0
      %v802 = vadd.s32 %v798, %v794
      %v803 = vadd.s32 %v799, %v801
      %v804 = vadd.s32 %v803, %v793
      %v805 = vadd.s32 %v804, %v795
      %v806 = vshrl.u32 %v805, 4
      %v807 = vmul.u32 %v806, 18
      %v808 = vsub.s32 %v784, %v807
      %v809 = vsub.s32 0, %v808
      %v810 = vsel %vm782, %v809, %v808
      %vm811 = vcmp.lt.s32.totalorder %v752, 0
      %v812 = vsub.s32 0, %v752
      %v813 = vsel %vm811, %v812, %v752
      %v814 = vand.u32 %v813, 65535
      %v815 = vshrl.u32 %v813, 16
      %v817 = vmul.u32 %v814, 14564
      %v818 = vmul.u32 %v814, 58254
      %v819 = vmul.u32 %v815, 14564
      %v820 = vmul.u32 %v815, 58254
      %v821 = vshll.u32 %v818, 16
      %v822 = vshrl.u32 %v818, 16
      %v823 = vshll.u32 %v819, 16
      %v824 = vshrl.u32 %v819, 16
      %vm825 = vc.u32 %v817, %v821
      %v826 = vsel %vm825, 1, 0
      %v827 = vadd.s32 %v817, %v821
      %v828 = vadd.s32 %v820, %v826
      %vm829 = vc.u32 %v827, %v823
      %v830 = vsel %vm829, 1, 0
      %v831 = vadd.s32 %v827, %v823
      %v832 = vadd.s32 %v828, %v830
      %v833 = vadd.s32 %v832, %v822
      %v834 = vadd.s32 %v833, %v824
      %v835 = vshrl.u32 %v834, 4
      %v836 = vmul.u32 %v835, 18
      %v837 = vsub.s32 %v813, %v836
      %v838 = vsub.s32 0, %v837
      %v839 = vsel %vm811, %v838, %v837
      %vm840 = vcmp.ne.s32.totalorder %v781, 0
      %vm841 = vcmp.ne.s32.totalorder %v810, 0
      %vm842 = vcmp.ne.s32.totalorder %v839, 0
      %vm843 = vcmp.lt.s32.totalorder %v781, 0
      %vm844 = vcmp.lt.s32.totalorder %v810, 0
      %vm845 = vcmp.lt.s32.totalorder %v839, 0
      %vm846 = vmand %vm843, %vm840
      %vm847 = vmand %vm844, %vm841
      %vm848 = vmand %vm845, %vm842
      %v849 = vadd.s32 %v781, 18
      %v850 = vadd.s32 %v810, 18
      %v851 = vadd.s32 %v839, 18
      %v852 = vsel %vm846, %v849, %v781
      %v853 = vsel %vm847, %v850, %v810
      %v854 = vsel %vm848, %v851, %v839
      %vm855 = vcmp.lt.s32.totalorder %v852, 16
      %vm856 = vcmp.lt.s32.totalorder %v853, 16
      %vm857 = vcmp.lt.s32.totalorder %v854, 16
      %v858 = vsel %vm855, 1, 0
      %v859 = vsel %vm856, 1, 0
      %v860 = vsel %vm857, 1, 0
      %vm861 = vcmp.eq.s32.totalorder %v858, 1
      %vm862 = vcmp.eq.s32.totalorder %v859, 1
      %vm863 = vcmp.eq.s32.totalorder %v860, 1
      %v864 = vsel %vm861, %v746, 0.0
      %v865 = vsel %vm862, %v747, 0.0
      %v866 = vsel %vm863, %v748, 0.0
      %v867 = vld [vmem:[%s160] sm:$0xff]
      %v868 = vadd.f32 %v864, %v865
      %vm869 = vcmask 261120
      %v870 = vsel %vm869, %v866, 0.0
      %v871 = vadd.f32 %v868, %v870
      %872 = vadd.xlane.f32.xlu0 %v871
      %v873 = vpop.xlane.xlu0 %872
      %v874 = vadd.f32 %v867, %v873
      %vm875 = vcmask 7168
      %876 = vst.msk [vmem:[%s160] sm:$0xff] %vm875, %v874
      %v877 = vld [vmem:[%s160] sm:$0xff]
      %v878 = vmul.f32 %v864, %v864
      %v879 = vmul.f32 %v865, %v865
      %v880 = vmul.f32 %v866, %v866
      %v881 = vadd.f32 %v878, %v879
      %v882 = vsel %vm869, %v880, 0.0
      %v883 = vadd.f32 %v881, %v882
      %884 = vadd.xlane.f32.xlu0 %v883
      %v885 = vpop.xlane.xlu0 %884
      %v886 = vadd.f32 %v877, %v885
      %vm887 = vcmask 15368
      %888 = vst.msk [vmem:[%s160] sm:$0xff] %vm887, %v886
      %p889 = scmp.lt.s32.totalorder %s17, 1
      %s890 = scalar_select %p889, %s17, 1
      %s891 = smul.addr %s890, 8
      %s892 = scalar_lea.vmem %s2, %s891
      // Predicated region
      $region33: #{conv_single_forward.2} parent=27 // pred_check
        %p893 = pneg %p92
      $region34: #{conv_single_forward.2} parent=27 // pred_check_branch
        %895 = sbr.rel (%p893) target = $region36
      $region35: #{conv_single_forward.2} parent=27 // pred_region
        _
      $region36: #{conv_single_forward.2} parent=27 // pred_fallthru
        _
    $region28: #{conv_single_forward.2} parent=5 // pred_fallthru
      _
    %p896 = scmp.le.s32.totalorder 2, %s8
    // Predicated region
    $region37: #{conv_single_forward.2} parent=5 // pred_check
      %p897 = pneg %p896
    $region38: #{conv_single_forward.2} parent=5 // pred_check_branch
      %899 = sbr.rel (%p897) target = $region40
    $region39: #{conv_single_forward.2} parent=5 // pred_region
      %s900 = ssub.s32 %s8, 2
      // Predicated region
      $region41: #{conv_single_forward.2} parent=39 // pred_check
        %p901 = pneg %p98
      $region42: #{conv_single_forward.2} parent=39 // pred_check_branch
        %903 = sbr.rel (%p901) target = $region44
      $region43: #{conv_single_forward.2} parent=39 // pred_region
        %p904 = scmp.lt.s32.totalorder %s19, 1
        %s905 = scalar_select %p904, %s19, 1
        %s906 = smul.addr %s905, 8
        %s907 = scalar_lea.vmem %s2, %s906
      $region44: #{conv_single_forward.2} parent=39 // pred_fallthru
        _
    $region40: #{conv_single_forward.2} parent=5 // pred_fallthru
      _
  $region6: #{conv_single_forward.2} parent=0 // loop_footer
    %s12 = sadd.s32 1, %s8
  $region7: #{conv_single_forward.2} parent=0 // loop_footer_branch
    %7 = sbr.rel target = $region3
  $region8: #{conv_single_forward.2} parent=0 // loop_exit
    _

</llo_original>
